<compile_context>
chip_gen: v7x
topology: tpu7x:2x2x1
jax: 0.10.0
libtpu: 0.0.40
codegen_flags: <defaults>
</compile_context>

<pallas_src>
import math

import jax
import jax.numpy as jnp
from jax.experimental import pallas as pl
from jax.experimental.pallas import tpu as pltpu


def _round_up(x, m):
    return ((x + m - 1) // m) * m


def _lcm(a, b):
    return a * b // math.gcd(a, b)


# -----------------------------------------------------------------------------
# Kernel factory
# -----------------------------------------------------------------------------
def make_cond_curve_kernel(n0, n1, nm, T, tile_b, D, lane_dense):
    """n0/n1 = #Linear layers in the x0/x1 embedding MLPs, nm = mod-MLP layers."""
    n_w = n0 + n1 + 2 + (nm - 1)          # emb0, emb1, Wm_a, Wm_b, mod[1:]

    def kernel(*refs):
        x0_ref, x1_ref, t_ref, env_ref, pt_ref = refs[:5]
        w_refs = refs[5:5 + n_w]
        bias_ref = refs[5 + n_w]
        out_ref = refs[5 + n_w + 1]

        def bias(row, width):
            # Ref-slice per layer (zero cost) instead of loading the whole pack.
            return bias_ref[row:row + 1, :width]

        def emb_mlp(x, w_off, b_off, n_layers):
            h = x
            for i in range(n_layers):
                w = w_refs[w_off + i][...]
                h = (jnp.dot(h, w, preferred_element_type=jnp.float32)
                     + bias(b_off + i, w.shape[1]))
                if i < n_layers - 1:
                    h = jnp.maximum(h, 0.0)
            return h

        x0t = x0_ref[...]                  # [TB, D]  (per batch tile, pipelined)
        x1t = x1_ref[...]                  # [TB, D]
        tv = t_ref[...]                    # [T, 1] (dense) / [T, 1, 1] (fallback)
        env = env_ref[...]                 # same rank as tv: scale*(1-(2t-1)^k)
        pt = pt_ref[...]                   # [T, 1, Hm]  per-t mod-layer-0 term

        # Per-batch-row work is done once per tile (not once per t*b row).
        ex0 = emb_mlp(x0t, 0, 0, n0)       # [TB, E0]
        ex1 = emb_mlp(x1t, n0, n0, n1)     # [TB, E1]

        # mod-MLP layer 0 with split weights (no lane-dim concat of embeddings).
        wa = w_refs[n0 + n1][...]          # rows of W_mod0 for emb_x0
        wb = w_refs[n0 + n1 + 1][...]      # rows of W_mod0 for emb_x1
        hm0 = wa.shape[1]
        pb = (jnp.dot(ex0, wa, preferred_element_type=jnp.float32)
              + jnp.dot(ex1, wb, preferred_element_type=jnp.float32)
              + bias(n0 + n1, hm0))        # [TB, Hm]

        # (t, b) cross terms via unit-dim broadcasting (replaces S-matmul and
        # T-fold concats); leading-dim merge is free since tile_b % 8 == 0.
        h = (pt + pb[None, :, :]).reshape(T * tile_b, hm0)    # [T*TB, Hm]
        if nm > 1:
            h = jnp.maximum(h, 0.0)
            for i in range(1, nm):
                w = w_refs[n0 + n1 + 1 + i][...]
                h = (jnp.dot(h, w, preferred_element_type=jnp.float32)
                     + bias(n0 + n1 + i, w.shape[1]))
                if i < nm - 1:
                    h = jnp.maximum(h, 0.0)
        mod = h                            # [T*TB, D]  (t-major, b-minor)

        if lane_dense:
            # Lane-dense epilogue: one relayout each for mod/x0/x1, then every
            # tail VPU op and every store is 128-lane dense ([T, TB*D]).
            mod_f = mod.reshape(T, tile_b * D)
            x0f = x0t.reshape(1, tile_b * D)
            x1f = x1t.reshape(1, tile_b * D)
            init = (1.0 - tv) * x0f + tv * x1f                # [T, TB*D]
            out_ref[...] = mod_f * env + init
        else:
            # Fallback layout [T, TB, D] (always lowers; D-wide masked stores).
            mod3 = mod.reshape(T, tile_b, D)
            init = (1.0 - tv) * x0t[None, :, :] + tv * x1t[None, :, :]
            out_ref[...] = mod3 * env + init

    return kernel


# -----------------------------------------------------------------------------
# Wrapper
# -----------------------------------------------------------------------------
def cond_curve_forward(x0, x1, t, params, *, scale_factor=1.0, k=2,
                       tile_b=None, lane_dense=None,
                       vmem_budget_bytes=20 * 1024 * 1024,
                       vmem_limit_bytes=40 * 1024 * 1024):
    """
    x0: [B, D], x1: [B, D], t: [T] or [T, 1]
    params: [x0_emb, x1_emb, t_emb, mod_x0_x1]; each MLP is a list of
            (W[in, out], b[out] or [1, out]) tuples.
    Returns: [T, B, D]  (== CondCurve.forward with embed_t=True, init='line')
    """
    x0 = jnp.asarray(x0, jnp.float32)
    x1 = jnp.asarray(x1, jnp.float32)
    t = jnp.asarray(t, jnp.float32).reshape(-1, 1)
    B, D = x0.shape
    T = t.shape[0]
    p_x0, p_x1, p_t, p_mod = params
    n0, n1, nt, nm = len(p_x0), len(p_x1), len(p_t), len(p_mod)

    def _w(a):
        return jnp.asarray(a, jnp.float32)

    def _b(a):
        return jnp.asarray(a, jnp.float32).reshape(-1)

    # --- shape validation: fail loudly instead of silently mis-slicing -------
    for grp in (p_x0, p_x1, p_t, p_mod):
        prev = None
        for (w, b) in grp:
            assert _b(b).shape[0] == w.shape[1], "bias width != layer out width"
            if prev is not None:
                assert w.shape[0] == prev, "MLP layer widths do not chain"
            prev = w.shape[1]
    E0 = p_x0[-1][0].shape[1]
    E1 = p_x1[-1][0].shape[1]
    Et = p_t[-1][0].shape[1]
    assert p_x0[0][0].shape[0] == D and p_x1[0][0].shape[0] == D
    assert p_t[0][0].shape[0] == 1
    assert p_mod[0][0].shape[0] == E0 + E1 + Et, \
        "mod MLP input dim must equal E0+E1+Et (embed_t=True layout)"
    assert p_mod[-1][0].shape[1] == D, "mod MLP must output input_dim"

    # --- t-only path: computed once per call on the T unique t values --------
    # (Hoisted to the wrapper instead of a pl.when(program_id==0) scratch: with
    #  a "parallel" grid axis, program 0 only runs on one TensorCore and
    #  persistent scratch is per-core, so scratch init would break on v7x.)
    hi = jax.lax.Precision.HIGHEST
    et = t
    for i, (w, b) in enumerate(p_t):
        et = jnp.dot(et, _w(w), precision=hi) + _b(b)[None, :]
        if i < nt - 1:
            et = jnp.maximum(et, 0.0)
    wm0 = _w(p_mod[0][0])
    wm_a, wm_b, wm_c = wm0[:E0], wm0[E0:E0 + E1], wm0[E0 + E1:]
    pt = jnp.dot(et, wm_c, precision=hi)                 # [T, Hm]
    pt3 = pt[:, None, :]                                 # [T, 1, Hm]
    env = scale_factor * (1.0 - (2.0 * t - 1.0) ** k)    # [T, 1]

    # --- weights (mod layer-0 split into per-embedding row blocks) -----------
    w_list = ([_w(w) for (w, _) in p_x0] + [_w(w) for (w, _) in p_x1]
              + [wm_a, wm_b] + [_w(w) for (w, _) in p_mod[1:]])

    # --- packed biases (one resident array; ref-sliced per layer in-kernel) --
    bias_rows = ([_b(b) for (_, b) in p_x0] + [_b(b) for (_, b) in p_x1]
                 + [_b(b) for (_, b) in p_mod])
    max_w = max(r.shape[0] for r in bias_rows)
    bias_pack = jnp.stack(
        [jnp.pad(r, (0, max_w - r.shape[0])) for r in bias_rows], axis=0)

    max_width = max([D] + [w.shape[1] for w in w_list])

    def _resident(shape):
        nd = len(shape)
        return pl.BlockSpec(tuple(shape), lambda i, _nd=nd: (0,) * _nd)

    def _pick_tile(t_mult):
        if tile_b is not None:
            return max(t_mult, _round_up(int(tile_b), t_mult))
        b_al = _round_up(B, t_mult)

        def est(tb):  # rough per-step live VMEM set in bytes
            return 4 * (4 * tb * D                         # x0/x1 double-buffered
                        + 2 * T * tb * D                   # out block dbl-buffered
                        + 6 * T * tb * max(max_width, D)   # h / mod / init / temps
                        + 4 * tb * max_width)               # ex0 / ex1 / pb
        tb = max(t_mult, (min(2048, b_al) // t_mult) * t_mult)
        while tb > t_mult and est(tb) > vmem_budget_bytes:
            tb -= t_mult
        if b_al >= 2 * t_mult:
            # Keep >= 2 grid steps so the "parallel" axis can shard across the
            # two TensorCores on v7x.
            tb = max(t_mult, min(tb, (b_al // 2 // t_mult) * t_mult))
        return tb

    def _run(dense):
        # For the lane-dense output block (T, tile_b*D) the last dim must be a
        # multiple of 128, so tile_b must be a multiple of 128/gcd(D,128).
        t_mult = _lcm(8, 128 // math.gcd(D, 128)) if dense else 8
        tb = _pick_tile(t_mult)
        b_pad = _round_up(B, tb)
        x0p = jnp.pad(x0, ((0, b_pad - B), (0, 0))) if b_pad != B else x0
        x1p = jnp.pad(x1, ((0, b_pad - B), (0, 0))) if b_pad != B else x1
        t_in = t if dense else t.reshape(T, 1, 1)
        env_in = env if dense else env.reshape(T, 1, 1)

        in_specs = ([pl.BlockSpec((tb, D), lambda i: (i, 0)),       # x0 (pipelined)
                     pl.BlockSpec((tb, D), lambda i: (i, 0)),       # x1 (pipelined)
                     _resident(t_in.shape),
                     _resident(env_in.shape),
                     _resident(pt3.shape)]
                    + [_resident(tuple(w.shape)) for w in w_list]
                    + [_resident(tuple(bias_pack.shape))])
        if dense:
            out_shape = jax.ShapeDtypeStruct((T, b_pad * D), jnp.float32)
            out_spec = pl.BlockSpec((T, tb * D), lambda i: (0, i))
        else:
            out_shape = jax.ShapeDtypeStruct((T, b_pad, D), jnp.float32)
            out_spec = pl.BlockSpec((T, tb, D), lambda i: (0, i, 0))

        kernel = make_cond_curve_kernel(n0, n1, nm, T, tb, D, dense)
        out = pl.pallas_call(
            kernel,
            out_shape=out_shape,
            grid=(b_pad // tb,),
            in_specs=in_specs,
            out_specs=out_spec,
            compiler_params=pltpu.CompilerParams(
                dimension_semantics=("parallel",),
                vmem_limit_bytes=int(vmem_limit_bytes)),
        )(x0p, x1p, t_in, env_in, pt3, *w_list, bias_pack)
        if dense:
            out = out.reshape(T, b_pad, D)   # free trailing split in HBM
        return out[:, :B, :]

    if lane_dense is not None:
        return _run(bool(lane_dense))
    try:
        # Fast path: lane-dense [T, tile_b*D] epilogue + stores.
        return _run(True)
    except Exception:
        # The lane-merging relayout did not lower on this toolchain; use the
        # always-supported [T, tile_b, D] output layout instead.
        return _run(False)


# -----------------------------------------------------------------------------
# Deterministic parameter init (kaiming-normal weights, small random biases so
# the bias-packing / row-indexing is actually exercised by the check).
# -----------------------------------------------------------------------------
def init_mlp_params(key, in_dim, hidden_dim, out_dim, num_hidden_layers):
    dims = [in_dim] + [hidden_dim] * num_hidden_layers + [out_dim]
    layers = []
    for i in range(len(dims) - 1):
        key, kw, kb = jax.random.split(key, 3)
        w = jax.random.normal(kw, (dims[i], dims[i + 1]), jnp.float32) \
            * jnp.sqrt(2.0 / dims[i])
        b = 0.1 * jax.random.normal(kb, (dims[i + 1],), jnp.float32)
        layers.append((w, b))
    return key, layers


# -----------------------------------------------------------------------------
# Pure-JAX reference (mirrors the torch forward exactly; HIGHEST precision so
# the tolerance can be tight).
# -----------------------------------------------------------------------------
def _mlp_ref(x, layers):
    h = x
    for i, (w, b) in enumerate(layers):
        h = jnp.dot(h, w, precision=jax.lax.Precision.HIGHEST) + b.reshape(1, -1)
        if i < len(layers) - 1:
            h = jnp.maximum(h, 0.0)
    return h


def cond_curve_ref(x0, x1, t, params, *, scale_factor=1.0, k=2):
    B, D = x0.shape
    t = t.reshape(-1, 1)
    T = t.shape[0]
    x0_ = jnp.tile(x0, (T, 1))
    x1_ = jnp.tile(x1, (T, 1))
    t_ = jnp.repeat(t, B, axis=0)
    emb_x0 = _mlp_ref(x0_, params[0])
    emb_x1 = _mlp_ref(x1_, params[1])
    emb_t = _mlp_ref(t_, params[2])
    aug = jnp.concatenate([emb_x0, emb_x1, emb_t], axis=-1)
    mod = _mlp_ref(aug, params[3])
    env = scale_factor * (1.0 - (t_ * 2.0 - 1.0) ** k)
    init = (1.0 - t_) * x0_ + t_ * x1_
    return (mod * env + init).reshape(T, B, D)


# -----------------------------------------------------------------------------
# TODO(synk): init_method='djikstra'/'diffusion' (networkx graph construction,
# random walks, matplotlib/plotly plotting) and the embed_t=False aug layout
# have no Pallas equivalent; only embed_t=True + init_method='line' is fused.
# -----------------------------------------------------------------------------
if __name__ == "__main__":
    input_dim = 16      # D
    hidden_dim = 32     # H
    num_layers = 2      # -> 3 Linear layers per MLP
    scale_factor = 1.0
    k = 2
    B, T = 20, 8        # B=20 pads to 24 -> 3 grid steps with tile_b=8

    key = jax.random.PRNGKey(0)
    key, kx0, kx1 = jax.random.split(key, 3)
    x0 = jax.random.normal(kx0, (B, input_dim), jnp.float32)
    x1 = jax.random.normal(kx1, (B, input_dim), jnp.float32)
    t = jnp.linspace(0.0, 1.0, T, dtype=jnp.float32).reshape(T, 1)

    # Four MLPs: x0_emb, x1_emb, t_emb, mod_x0_x1 (aug_dim = 3H since embed_t).
    key, p_x0 = init_mlp_params(key, input_dim, hidden_dim, hidden_dim, num_layers)
    key, p_x1 = init_mlp_params(key, input_dim, hidden_dim, hidden_dim, num_layers)
    key, p_t = init_mlp_params(key, 1, hidden_dim, hidden_dim, num_layers)
    key, p_mod = init_mlp_params(key, 3 * hidden_dim, hidden_dim, input_dim, num_layers)
    params = [p_x0, p_x1, p_t, p_mod]

    out = cond_curve_forward(x0, x1, t, params, scale_factor=scale_factor, k=k)
    out = jax.block_until_ready(out)

    ref = cond_curve_ref(x0, x1, t, params, scale_factor=scale_factor, k=k)
    assert out.shape == (T, B, input_dim)
    # Tight tolerance (all-f32 kernel; only split-weight reassociation and MXU
    # f32 multi-pass rounding separate it from the HIGHEST-precision reference).
    assert jnp.allclose(out, ref, atol=1e-3, rtol=1e-3), "mismatch vs reference"

    print("KERNEL_OK")
</pallas_src>

<mosaic_0001>
module attributes {stable_mosaic.version = 11 : i64} {
  func.func @kernel(%arg0: i32, %arg1: memref<8x16xf32, #tpu.memory_space<vmem>>, %arg2: memref<8x16xf32, #tpu.memory_space<vmem>>, %arg3: memref<8x1xf32, #tpu.memory_space<vmem>>, %arg4: memref<8x1xf32, #tpu.memory_space<vmem>>, %arg5: memref<8x1x32xf32, #tpu.memory_space<vmem>>, %arg6: memref<16x32xf32, #tpu.memory_space<vmem>>, %arg7: memref<32x32xf32, #tpu.memory_space<vmem>>, %arg8: memref<32x32xf32, #tpu.memory_space<vmem>>, %arg9: memref<16x32xf32, #tpu.memory_space<vmem>>, %arg10: memref<32x32xf32, #tpu.memory_space<vmem>>, %arg11: memref<32x32xf32, #tpu.memory_space<vmem>>, %arg12: memref<32x32xf32, #tpu.memory_space<vmem>>, %arg13: memref<32x32xf32, #tpu.memory_space<vmem>>, %arg14: memref<32x32xf32, #tpu.memory_space<vmem>>, %arg15: memref<32x16xf32, #tpu.memory_space<vmem>>, %arg16: memref<9x32xf32, #tpu.memory_space<vmem>>, %arg17: memref<8x128xf32, #tpu.memory_space<vmem>>) attributes {dimension_semantics = [#tpu.dimension_semantics<parallel>], iteration_bounds = array<i64: 3>, scalar_prefetch = 0 : i64, scratch_operands = 0 : i64, tpu.core_type = #tpu.core_type<tc>, window_params = [{transform_indices = @transform_0, window_bounds = array<i64: 8, 16>}, {transform_indices = @transform_1, window_bounds = array<i64: 8, 16>}, {pipeline_mode = #tpu.pipeline_mode<synchronous>, transform_indices = @transform_2, window_bounds = array<i64: 8, 1>}, {pipeline_mode = #tpu.pipeline_mode<synchronous>, transform_indices = @transform_3, window_bounds = array<i64: 8, 1>}, {pipeline_mode = #tpu.pipeline_mode<synchronous>, transform_indices = @transform_4, window_bounds = array<i64: 8, 1, 32>}, {pipeline_mode = #tpu.pipeline_mode<synchronous>, transform_indices = @transform_5, window_bounds = array<i64: 16, 32>}, {pipeline_mode = #tpu.pipeline_mode<synchronous>, transform_indices = @transform_6, window_bounds = array<i64: 32, 32>}, {pipeline_mode = #tpu.pipeline_mode<synchronous>, transform_indices = @transform_7, window_bounds = array<i64: 32, 32>}, {pipeline_mode = #tpu.pipeline_mode<synchronous>, transform_indices = @transform_8, window_bounds = array<i64: 16, 32>}, {pipeline_mode = #tpu.pipeline_mode<synchronous>, transform_indices = @transform_9, window_bounds = array<i64: 32, 32>}, {pipeline_mode = #tpu.pipeline_mode<synchronous>, transform_indices = @transform_10, window_bounds = array<i64: 32, 32>}, {pipeline_mode = #tpu.pipeline_mode<synchronous>, transform_indices = @transform_11, window_bounds = array<i64: 32, 32>}, {pipeline_mode = #tpu.pipeline_mode<synchronous>, transform_indices = @transform_12, window_bounds = array<i64: 32, 32>}, {pipeline_mode = #tpu.pipeline_mode<synchronous>, transform_indices = @transform_13, window_bounds = array<i64: 32, 32>}, {pipeline_mode = #tpu.pipeline_mode<synchronous>, transform_indices = @transform_14, window_bounds = array<i64: 32, 16>}, {pipeline_mode = #tpu.pipeline_mode<synchronous>, transform_indices = @transform_15, window_bounds = array<i64: 9, 32>}, {transform_indices = @transform_16, window_bounds = array<i64: 8, 128>}]} {
    %c0 = arith.constant 0 : index
    %c0_0 = arith.constant 0 : index
    %0 = vector.load %arg1[%c0, %c0_0] : memref<8x16xf32, #tpu.memory_space<vmem>>, vector<8x16xf32>
    %c0_1 = arith.constant 0 : index
    %c0_2 = arith.constant 0 : index
    %1 = vector.load %arg2[%c0_1, %c0_2] : memref<8x16xf32, #tpu.memory_space<vmem>>, vector<8x16xf32>
    %c0_3 = arith.constant 0 : index
    %c0_4 = arith.constant 0 : index
    %2 = vector.load %arg3[%c0_3, %c0_4] : memref<8x1xf32, #tpu.memory_space<vmem>>, vector<8x1xf32>
    %c0_5 = arith.constant 0 : index
    %c0_6 = arith.constant 0 : index
    %3 = vector.load %arg4[%c0_5, %c0_6] : memref<8x1xf32, #tpu.memory_space<vmem>>, vector<8x1xf32>
    %c0_7 = arith.constant 0 : index
    %c0_8 = arith.constant 0 : index
    %c0_9 = arith.constant 0 : index
    %4 = vector.load %arg5[%c0_7, %c0_8, %c0_9] : memref<8x1x32xf32, #tpu.memory_space<vmem>>, vector<8x1x32xf32>
    %c0_10 = arith.constant 0 : index
    %c0_11 = arith.constant 0 : index
    %5 = vector.load %arg6[%c0_10, %c0_11] : memref<16x32xf32, #tpu.memory_space<vmem>>, vector<16x32xf32>
    %cst = arith.constant dense<0.000000e+00> : vector<8x32xf32>
    %6 = tpu.matmul %0, %5, %cst {dimension_numbers = #tpu.dot_dimension_numbers<[1], [0], [0], [1], [0, 0, 1, 1], [], []>} : vector<8x16xf32>, vector<16x32xf32>, vector<8x32xf32> -> vector<8x32xf32>
    %c0_12 = arith.constant 0 : index
    %c0_13 = arith.constant 0 : index
    %7 = vector.load %arg16[%c0_12, %c0_13] : memref<9x32xf32, #tpu.memory_space<vmem>>, vector<1x32xf32>
    %8 = vector.broadcast %7 : vector<1x32xf32> to vector<8x32xf32>
    %9 = arith.addf %6, %8 : vector<8x32xf32>
    %cst_14 = arith.constant 0.000000e+00 : f32
    %10 = vector.broadcast %cst_14 : f32 to vector<8x32xf32>
    %11 = arith.maximumf %9, %10 : vector<8x32xf32>
    %c0_15 = arith.constant 0 : index
    %c0_16 = arith.constant 0 : index
    %12 = vector.load %arg7[%c0_15, %c0_16] : memref<32x32xf32, #tpu.memory_space<vmem>>, vector<32x32xf32>
    %cst_17 = arith.constant dense<0.000000e+00> : vector<8x32xf32>
    %13 = tpu.matmul %11, %12, %cst_17 {dimension_numbers = #tpu.dot_dimension_numbers<[1], [0], [0], [1], [0, 0, 1, 1], [], []>} : vector<8x32xf32>, vector<32x32xf32>, vector<8x32xf32> -> vector<8x32xf32>
    %c1 = arith.constant 1 : index
    %c0_18 = arith.constant 0 : index
    %14 = vector.load %arg16[%c1, %c0_18] : memref<9x32xf32, #tpu.memory_space<vmem>>, vector<1x32xf32>
    %15 = vector.broadcast %14 : vector<1x32xf32> to vector<8x32xf32>
    %16 = arith.addf %13, %15 : vector<8x32xf32>
    %cst_19 = arith.constant 0.000000e+00 : f32
    %17 = vector.broadcast %cst_19 : f32 to vector<8x32xf32>
    %18 = arith.maximumf %16, %17 : vector<8x32xf32>
    %c0_20 = arith.constant 0 : index
    %c0_21 = arith.constant 0 : index
    %19 = vector.load %arg8[%c0_20, %c0_21] : memref<32x32xf32, #tpu.memory_space<vmem>>, vector<32x32xf32>
    %cst_22 = arith.constant dense<0.000000e+00> : vector<8x32xf32>
    %20 = tpu.matmul %18, %19, %cst_22 {dimension_numbers = #tpu.dot_dimension_numbers<[1], [0], [0], [1], [0, 0, 1, 1], [], []>} : vector<8x32xf32>, vector<32x32xf32>, vector<8x32xf32> -> vector<8x32xf32>
    %c2 = arith.constant 2 : index
    %c0_23 = arith.constant 0 : index
    %21 = vector.load %arg16[%c2, %c0_23] : memref<9x32xf32, #tpu.memory_space<vmem>>, vector<1x32xf32>
    %22 = vector.broadcast %21 : vector<1x32xf32> to vector<8x32xf32>
    %23 = arith.addf %20, %22 : vector<8x32xf32>
    %c0_24 = arith.constant 0 : index
    %c0_25 = arith.constant 0 : index
    %24 = vector.load %arg9[%c0_24, %c0_25] : memref<16x32xf32, #tpu.memory_space<vmem>>, vector<16x32xf32>
    %cst_26 = arith.constant dense<0.000000e+00> : vector<8x32xf32>
    %25 = tpu.matmul %1, %24, %cst_26 {dimension_numbers = #tpu.dot_dimension_numbers<[1], [0], [0], [1], [0, 0, 1, 1], [], []>} : vector<8x16xf32>, vector<16x32xf32>, vector<8x32xf32> -> vector<8x32xf32>
    %c3 = arith.constant 3 : index
    %c0_27 = arith.constant 0 : index
    %26 = vector.load %arg16[%c3, %c0_27] : memref<9x32xf32, #tpu.memory_space<vmem>>, vector<1x32xf32>
    %27 = vector.broadcast %26 : vector<1x32xf32> to vector<8x32xf32>
    %28 = arith.addf %25, %27 : vector<8x32xf32>
    %cst_28 = arith.constant 0.000000e+00 : f32
    %29 = vector.broadcast %cst_28 : f32 to vector<8x32xf32>
    %30 = arith.maximumf %28, %29 : vector<8x32xf32>
    %c0_29 = arith.constant 0 : index
    %c0_30 = arith.constant 0 : index
    %31 = vector.load %arg10[%c0_29, %c0_30] : memref<32x32xf32, #tpu.memory_space<vmem>>, vector<32x32xf32>
    %cst_31 = arith.constant dense<0.000000e+00> : vector<8x32xf32>
    %32 = tpu.matmul %30, %31, %cst_31 {dimension_numbers = #tpu.dot_dimension_numbers<[1], [0], [0], [1], [0, 0, 1, 1], [], []>} : vector<8x32xf32>, vector<32x32xf32>, vector<8x32xf32> -> vector<8x32xf32>
    %c4 = arith.constant 4 : index
    %c0_32 = arith.constant 0 : index
    %33 = vector.load %arg16[%c4, %c0_32] : memref<9x32xf32, #tpu.memory_space<vmem>>, vector<1x32xf32>
    %34 = vector.broadcast %33 : vector<1x32xf32> to vector<8x32xf32>
    %35 = arith.addf %32, %34 : vector<8x32xf32>
    %cst_33 = arith.constant 0.000000e+00 : f32
    %36 = vector.broadcast %cst_33 : f32 to vector<8x32xf32>
    %37 = arith.maximumf %35, %36 : vector<8x32xf32>
    %c0_34 = arith.constant 0 : index
    %c0_35 = arith.constant 0 : index
    %38 = vector.load %arg11[%c0_34, %c0_35] : memref<32x32xf32, #tpu.memory_space<vmem>>, vector<32x32xf32>
    %cst_36 = arith.constant dense<0.000000e+00> : vector<8x32xf32>
    %39 = tpu.matmul %37, %38, %cst_36 {dimension_numbers = #tpu.dot_dimension_numbers<[1], [0], [0], [1], [0, 0, 1, 1], [], []>} : vector<8x32xf32>, vector<32x32xf32>, vector<8x32xf32> -> vector<8x32xf32>
    %c5 = arith.constant 5 : index
    %c0_37 = arith.constant 0 : index
    %40 = vector.load %arg16[%c5, %c0_37] : memref<9x32xf32, #tpu.memory_space<vmem>>, vector<1x32xf32>
    %41 = vector.broadcast %40 : vector<1x32xf32> to vector<8x32xf32>
    %42 = arith.addf %39, %41 : vector<8x32xf32>
    %c0_38 = arith.constant 0 : index
    %c0_39 = arith.constant 0 : index
    %43 = vector.load %arg12[%c0_38, %c0_39] : memref<32x32xf32, #tpu.memory_space<vmem>>, vector<32x32xf32>
    %c0_40 = arith.constant 0 : index
    %c0_41 = arith.constant 0 : index
    %44 = vector.load %arg13[%c0_40, %c0_41] : memref<32x32xf32, #tpu.memory_space<vmem>>, vector<32x32xf32>
    %cst_42 = arith.constant dense<0.000000e+00> : vector<8x32xf32>
    %45 = tpu.matmul %23, %43, %cst_42 {dimension_numbers = #tpu.dot_dimension_numbers<[1], [0], [0], [1], [0, 0, 1, 1], [], []>} : vector<8x32xf32>, vector<32x32xf32>, vector<8x32xf32> -> vector<8x32xf32>
    %cst_43 = arith.constant dense<0.000000e+00> : vector<8x32xf32>
    %46 = tpu.matmul %42, %44, %cst_43 {dimension_numbers = #tpu.dot_dimension_numbers<[1], [0], [0], [1], [0, 0, 1, 1], [], []>} : vector<8x32xf32>, vector<32x32xf32>, vector<8x32xf32> -> vector<8x32xf32>
    %47 = arith.addf %45, %46 : vector<8x32xf32>
    %c6 = arith.constant 6 : index
    %c0_44 = arith.constant 0 : index
    %48 = vector.load %arg16[%c6, %c0_44] : memref<9x32xf32, #tpu.memory_space<vmem>>, vector<1x32xf32>
    %49 = vector.broadcast %48 : vector<1x32xf32> to vector<8x32xf32>
    %50 = arith.addf %47, %49 : vector<8x32xf32>
    %51 = vector.shape_cast %50 : vector<8x32xf32> to vector<1x8x32xf32>
    %52 = vector.broadcast %4 : vector<8x1x32xf32> to vector<8x8x32xf32>
    %53 = vector.broadcast %51 : vector<1x8x32xf32> to vector<8x8x32xf32>
    %54 = arith.addf %52, %53 : vector<8x8x32xf32>
    %55 = vector.shape_cast %54 : vector<8x8x32xf32> to vector<64x32xf32>
    %cst_45 = arith.constant 0.000000e+00 : f32
    %56 = vector.broadcast %cst_45 : f32 to vector<64x32xf32>
    %57 = arith.maximumf %55, %56 : vector<64x32xf32>
    %c0_46 = arith.constant 0 : index
    %c0_47 = arith.constant 0 : index
    %58 = vector.load %arg14[%c0_46, %c0_47] : memref<32x32xf32, #tpu.memory_space<vmem>>, vector<32x32xf32>
    %cst_48 = arith.constant dense<0.000000e+00> : vector<64x32xf32>
    %59 = tpu.matmul %57, %58, %cst_48 {dimension_numbers = #tpu.dot_dimension_numbers<[1], [0], [0], [1], [0, 0, 1, 1], [], []>} : vector<64x32xf32>, vector<32x32xf32>, vector<64x32xf32> -> vector<64x32xf32>
    %c7 = arith.constant 7 : index
    %c0_49 = arith.constant 0 : index
    %60 = vector.load %arg16[%c7, %c0_49] : memref<9x32xf32, #tpu.memory_space<vmem>>, vector<1x32xf32>
    %61 = vector.broadcast %60 : vector<1x32xf32> to vector<64x32xf32>
    %62 = arith.addf %59, %61 : vector<64x32xf32>
    %cst_50 = arith.constant 0.000000e+00 : f32
    %63 = vector.broadcast %cst_50 : f32 to vector<64x32xf32>
    %64 = arith.maximumf %62, %63 : vector<64x32xf32>
    %c0_51 = arith.constant 0 : index
    %c0_52 = arith.constant 0 : index
    %65 = vector.load %arg15[%c0_51, %c0_52] : memref<32x16xf32, #tpu.memory_space<vmem>>, vector<32x16xf32>
    %cst_53 = arith.constant dense<0.000000e+00> : vector<64x16xf32>
    %66 = tpu.matmul %64, %65, %cst_53 {dimension_numbers = #tpu.dot_dimension_numbers<[1], [0], [0], [1], [0, 0, 1, 1], [], []>} : vector<64x32xf32>, vector<32x16xf32>, vector<64x16xf32> -> vector<64x16xf32>
    %c8 = arith.constant 8 : index
    %c0_54 = arith.constant 0 : index
    %67 = vector.load %arg16[%c8, %c0_54] : memref<9x32xf32, #tpu.memory_space<vmem>>, vector<1x16xf32>
    %68 = vector.broadcast %67 : vector<1x16xf32> to vector<64x16xf32>
    %69 = arith.addf %66, %68 : vector<64x16xf32>
    %70 = vector.shape_cast %69 : vector<64x16xf32> to vector<8x128xf32>
    %71 = vector.shape_cast %0 : vector<8x16xf32> to vector<1x128xf32>
    %72 = vector.shape_cast %1 : vector<8x16xf32> to vector<1x128xf32>
    %cst_55 = arith.constant 1.000000e+00 : f32
    %73 = vector.broadcast %cst_55 : f32 to vector<8x1xf32>
    %74 = arith.subf %73, %2 : vector<8x1xf32>
    %75 = vector.broadcast %74 : vector<8x1xf32> to vector<8x128xf32>
    %76 = vector.broadcast %71 : vector<1x128xf32> to vector<8x128xf32>
    %77 = arith.mulf %75, %76 : vector<8x128xf32>
    %78 = vector.broadcast %2 : vector<8x1xf32> to vector<8x128xf32>
    %79 = vector.broadcast %72 : vector<1x128xf32> to vector<8x128xf32>
    %80 = arith.mulf %78, %79 : vector<8x128xf32>
    %81 = arith.addf %77, %80 : vector<8x128xf32>
    %82 = vector.broadcast %3 : vector<8x1xf32> to vector<8x128xf32>
    %83 = arith.mulf %70, %82 : vector<8x128xf32>
    %84 = arith.addf %83, %81 : vector<8x128xf32>
    %c0_56 = arith.constant 0 : index
    %c0_57 = arith.constant 0 : index
    %85 = vector.load %arg17[%c0_56, %c0_57] : memref<8x128xf32, #tpu.memory_space<vmem>>, vector<8x128xf32>
    tpu.vector_store %arg17[%c0_56, %c0_57], %84 {strides = array<i32>} : memref<8x128xf32, #tpu.memory_space<vmem>>, vector<8x128xf32>,
    return
  }
  func.func @transform_0(%arg0: i32) -> (i32, i32) {
    %c0_i32 = arith.constant 0 : i32
    %c0_i32_0 = arith.constant 0 : i32
    return %arg0, %c0_i32 : i32, i32
  }
  func.func @transform_1(%arg0: i32) -> (i32, i32) {
    %c0_i32 = arith.constant 0 : i32
    %c0_i32_0 = arith.constant 0 : i32
    return %arg0, %c0_i32 : i32, i32
  }
  func.func @transform_2(%arg0: i32) -> (i32, i32) {
    %c0_i32 = arith.constant 0 : i32
    %c0_i32_0 = arith.constant 0 : i32
    %c0_i32_1 = arith.constant 0 : i32
    return %c0_i32, %c0_i32_0 : i32, i32
  }
  func.func @transform_3(%arg0: i32) -> (i32, i32) {
    %c0_i32 = arith.constant 0 : i32
    %c0_i32_0 = arith.constant 0 : i32
    %c0_i32_1 = arith.constant 0 : i32
    return %c0_i32, %c0_i32_0 : i32, i32
  }
  func.func @transform_4(%arg0: i32) -> (i32, i32, i32) {
    %c0_i32 = arith.constant 0 : i32
    %c0_i32_0 = arith.constant 0 : i32
    %c0_i32_1 = arith.constant 0 : i32
    %c0_i32_2 = arith.constant 0 : i32
    return %c0_i32, %c0_i32_0, %c0_i32_1 : i32, i32, i32
  }
  func.func @transform_5(%arg0: i32) -> (i32, i32) {
    %c0_i32 = arith.constant 0 : i32
    %c0_i32_0 = arith.constant 0 : i32
    %c0_i32_1 = arith.constant 0 : i32
    return %c0_i32, %c0_i32_0 : i32, i32
  }
  func.func @transform_6(%arg0: i32) -> (i32, i32) {
    %c0_i32 = arith.constant 0 : i32
    %c0_i32_0 = arith.constant 0 : i32
    %c0_i32_1 = arith.constant 0 : i32
    return %c0_i32, %c0_i32_0 : i32, i32
  }
  func.func @transform_7(%arg0: i32) -> (i32, i32) {
    %c0_i32 = arith.constant 0 : i32
    %c0_i32_0 = arith.constant 0 : i32
    %c0_i32_1 = arith.constant 0 : i32
    return %c0_i32, %c0_i32_0 : i32, i32
  }
  func.func @transform_8(%arg0: i32) -> (i32, i32) {
    %c0_i32 = arith.constant 0 : i32
    %c0_i32_0 = arith.constant 0 : i32
    %c0_i32_1 = arith.constant 0 : i32
    return %c0_i32, %c0_i32_0 : i32, i32
  }
  func.func @transform_9(%arg0: i32) -> (i32, i32) {
    %c0_i32 = arith.constant 0 : i32
    %c0_i32_0 = arith.constant 0 : i32
    %c0_i32_1 = arith.constant 0 : i32
    return %c0_i32, %c0_i32_0 : i32, i32
  }
  func.func @transform_10(%arg0: i32) -> (i32, i32) {
    %c0_i32 = arith.constant 0 : i32
    %c0_i32_0 = arith.constant 0 : i32
    %c0_i32_1 = arith.constant 0 : i32
    return %c0_i32, %c0_i32_0 : i32, i32
  }
  func.func @transform_11(%arg0: i32) -> (i32, i32) {
    %c0_i32 = arith.constant 0 : i32
    %c0_i32_0 = arith.constant 0 : i32
    %c0_i32_1 = arith.constant 0 : i32
    return %c0_i32, %c0_i32_0 : i32, i32
  }
  func.func @transform_12(%arg0: i32) -> (i32, i32) {
    %c0_i32 = arith.constant 0 : i32
    %c0_i32_0 = arith.constant 0 : i32
    %c0_i32_1 = arith.constant 0 : i32
    return %c0_i32, %c0_i32_0 : i32, i32
  }
  func.func @transform_13(%arg0: i32) -> (i32, i32) {
    %c0_i32 = arith.constant 0 : i32
    %c0_i32_0 = arith.constant 0 : i32
    %c0_i32_1 = arith.constant 0 : i32
    return %c0_i32, %c0_i32_0 : i32, i32
  }
  func.func @transform_14(%arg0: i32) -> (i32, i32) {
    %c0_i32 = arith.constant 0 : i32
    %c0_i32_0 = arith.constant 0 : i32
    %c0_i32_1 = arith.constant 0 : i32
    return %c0_i32, %c0_i32_0 : i32, i32
  }
  func.func @transform_15(%arg0: i32) -> (i32, i32) {
    %c0_i32 = arith.constant 0 : i32
    %c0_i32_0 = arith.constant 0 : i32
    %c0_i32_1 = arith.constant 0 : i32
    return %c0_i32, %c0_i32_0 : i32, i32
  }
  func.func @transform_16(%arg0: i32) -> (i32, i32) {
    %c0_i32 = arith.constant 0 : i32
    %c0_i32_0 = arith.constant 0 : i32
    return %c0_i32, %arg0 : i32, i32
  }
}

module attributes {stable_mosaic.version = 11 : i64} {
  func.func @kernel(%arg0: i32, %arg1: memref<8x16xf32, #tpu.memory_space<vmem>>, %arg2: memref<8x16xf32, #tpu.memory_space<vmem>>, %arg3: memref<8x1x1xf32, #tpu.memory_space<vmem>>, %arg4: memref<8x1x1xf32, #tpu.memory_space<vmem>>, %arg5: memref<8x1x32xf32, #tpu.memory_space<vmem>>, %arg6: memref<16x32xf32, #tpu.memory_space<vmem>>, %arg7: memref<32x32xf32, #tpu.memory_space<vmem>>, %arg8: memref<32x32xf32, #tpu.memory_space<vmem>>, %arg9: memref<16x32xf32, #tpu.memory_space<vmem>>, %arg10: memref<32x32xf32, #tpu.memory_space<vmem>>, %arg11: memref<32x32xf32, #tpu.memory_space<vmem>>, %arg12: memref<32x32xf32, #tpu.memory_space<vmem>>, %arg13: memref<32x32xf32, #tpu.memory_space<vmem>>, %arg14: memref<32x32xf32, #tpu.memory_space<vmem>>, %arg15: memref<32x16xf32, #tpu.memory_space<vmem>>, %arg16: memref<9x32xf32, #tpu.memory_space<vmem>>, %arg17: memref<8x8x16xf32, #tpu.memory_space<vmem>>) attributes {dimension_semantics = [#tpu.dimension_semantics<parallel>], iteration_bounds = array<i64: 3>, scalar_prefetch = 0 : i64, scratch_operands = 0 : i64, tpu.core_type = #tpu.core_type<tc>, window_params = [{transform_indices = @transform_0, window_bounds = array<i64: 8, 16>}, {transform_indices = @transform_1, window_bounds = array<i64: 8, 16>}, {pipeline_mode = #tpu.pipeline_mode<synchronous>, transform_indices = @transform_2, window_bounds = array<i64: 8, 1, 1>}, {pipeline_mode = #tpu.pipeline_mode<synchronous>, transform_indices = @transform_3, window_bounds = array<i64: 8, 1, 1>}, {pipeline_mode = #tpu.pipeline_mode<synchronous>, transform_indices = @transform_4, window_bounds = array<i64: 8, 1, 32>}, {pipeline_mode = #tpu.pipeline_mode<synchronous>, transform_indices = @transform_5, window_bounds = array<i64: 16, 32>}, {pipeline_mode = #tpu.pipeline_mode<synchronous>, transform_indices = @transform_6, window_bounds = array<i64: 32, 32>}, {pipeline_mode = #tpu.pipeline_mode<synchronous>, transform_indices = @transform_7, window_bounds = array<i64: 32, 32>}, {pipeline_mode = #tpu.pipeline_mode<synchronous>, transform_indices = @transform_8, window_bounds = array<i64: 16, 32>}, {pipeline_mode = #tpu.pipeline_mode<synchronous>, transform_indices = @transform_9, window_bounds = array<i64: 32, 32>}, {pipeline_mode = #tpu.pipeline_mode<synchronous>, transform_indices = @transform_10, window_bounds = array<i64: 32, 32>}, {pipeline_mode = #tpu.pipeline_mode<synchronous>, transform_indices = @transform_11, window_bounds = array<i64: 32, 32>}, {pipeline_mode = #tpu.pipeline_mode<synchronous>, transform_indices = @transform_12, window_bounds = array<i64: 32, 32>}, {pipeline_mode = #tpu.pipeline_mode<synchronous>, transform_indices = @transform_13, window_bounds = array<i64: 32, 32>}, {pipeline_mode = #tpu.pipeline_mode<synchronous>, transform_indices = @transform_14, window_bounds = array<i64: 32, 16>}, {pipeline_mode = #tpu.pipeline_mode<synchronous>, transform_indices = @transform_15, window_bounds = array<i64: 9, 32>}, {transform_indices = @transform_16, window_bounds = array<i64: 8, 8, 16>}]} {
    %c0 = arith.constant 0 : index
    %c0_0 = arith.constant 0 : index
    %0 = vector.load %arg1[%c0, %c0_0] : memref<8x16xf32, #tpu.memory_space<vmem>>, vector<8x16xf32>
    %c0_1 = arith.constant 0 : index
    %c0_2 = arith.constant 0 : index
    %1 = vector.load %arg2[%c0_1, %c0_2] : memref<8x16xf32, #tpu.memory_space<vmem>>, vector<8x16xf32>
    %c0_3 = arith.constant 0 : index
    %c0_4 = arith.constant 0 : index
    %c0_5 = arith.constant 0 : index
    %2 = vector.load %arg3[%c0_3, %c0_4, %c0_5] : memref<8x1x1xf32, #tpu.memory_space<vmem>>, vector<8x1x1xf32>
    %c0_6 = arith.constant 0 : index
    %c0_7 = arith.constant 0 : index
    %c0_8 = arith.constant 0 : index
    %3 = vector.load %arg4[%c0_6, %c0_7, %c0_8] : memref<8x1x1xf32, #tpu.memory_space<vmem>>, vector<8x1x1xf32>
    %c0_9 = arith.constant 0 : index
    %c0_10 = arith.constant 0 : index
    %c0_11 = arith.constant 0 : index
    %4 = vector.load %arg5[%c0_9, %c0_10, %c0_11] : memref<8x1x32xf32, #tpu.memory_space<vmem>>, vector<8x1x32xf32>
    %c0_12 = arith.constant 0 : index
    %c0_13 = arith.constant 0 : index
    %5 = vector.load %arg6[%c0_12, %c0_13] : memref<16x32xf32, #tpu.memory_space<vmem>>, vector<16x32xf32>
    %cst = arith.constant dense<0.000000e+00> : vector<8x32xf32>
    %6 = tpu.matmul %0, %5, %cst {dimension_numbers = #tpu.dot_dimension_numbers<[1], [0], [0], [1], [0, 0, 1, 1], [], []>} : vector<8x16xf32>, vector<16x32xf32>, vector<8x32xf32> -> vector<8x32xf32>
    %c0_14 = arith.constant 0 : index
    %c0_15 = arith.constant 0 : index
    %7 = vector.load %arg16[%c0_14, %c0_15] : memref<9x32xf32, #tpu.memory_space<vmem>>, vector<1x32xf32>
    %8 = vector.broadcast %7 : vector<1x32xf32> to vector<8x32xf32>
    %9 = arith.addf %6, %8 : vector<8x32xf32>
    %cst_16 = arith.constant 0.000000e+00 : f32
    %10 = vector.broadcast %cst_16 : f32 to vector<8x32xf32>
    %11 = arith.maximumf %9, %10 : vector<8x32xf32>
    %c0_17 = arith.constant 0 : index
    %c0_18 = arith.constant 0 : index
    %12 = vector.load %arg7[%c0_17, %c0_18] : memref<32x32xf32, #tpu.memory_space<vmem>>, vector<32x32xf32>
    %cst_19 = arith.constant dense<0.000000e+00> : vector<8x32xf32>
    %13 = tpu.matmul %11, %12, %cst_19 {dimension_numbers = #tpu.dot_dimension_numbers<[1], [0], [0], [1], [0, 0, 1, 1], [], []>} : vector<8x32xf32>, vector<32x32xf32>, vector<8x32xf32> -> vector<8x32xf32>
    %c1 = arith.constant 1 : index
    %c0_20 = arith.constant 0 : index
    %14 = vector.load %arg16[%c1, %c0_20] : memref<9x32xf32, #tpu.memory_space<vmem>>, vector<1x32xf32>
    %15 = vector.broadcast %14 : vector<1x32xf32> to vector<8x32xf32>
    %16 = arith.addf %13, %15 : vector<8x32xf32>
    %cst_21 = arith.constant 0.000000e+00 : f32
    %17 = vector.broadcast %cst_21 : f32 to vector<8x32xf32>
    %18 = arith.maximumf %16, %17 : vector<8x32xf32>
    %c0_22 = arith.constant 0 : index
    %c0_23 = arith.constant 0 : index
    %19 = vector.load %arg8[%c0_22, %c0_23] : memref<32x32xf32, #tpu.memory_space<vmem>>, vector<32x32xf32>
    %cst_24 = arith.constant dense<0.000000e+00> : vector<8x32xf32>
    %20 = tpu.matmul %18, %19, %cst_24 {dimension_numbers = #tpu.dot_dimension_numbers<[1], [0], [0], [1], [0, 0, 1, 1], [], []>} : vector<8x32xf32>, vector<32x32xf32>, vector<8x32xf32> -> vector<8x32xf32>
    %c2 = arith.constant 2 : index
    %c0_25 = arith.constant 0 : index
    %21 = vector.load %arg16[%c2, %c0_25] : memref<9x32xf32, #tpu.memory_space<vmem>>, vector<1x32xf32>
    %22 = vector.broadcast %21 : vector<1x32xf32> to vector<8x32xf32>
    %23 = arith.addf %20, %22 : vector<8x32xf32>
    %c0_26 = arith.constant 0 : index
    %c0_27 = arith.constant 0 : index
    %24 = vector.load %arg9[%c0_26, %c0_27] : memref<16x32xf32, #tpu.memory_space<vmem>>, vector<16x32xf32>
    %cst_28 = arith.constant dense<0.000000e+00> : vector<8x32xf32>
    %25 = tpu.matmul %1, %24, %cst_28 {dimension_numbers = #tpu.dot_dimension_numbers<[1], [0], [0], [1], [0, 0, 1, 1], [], []>} : vector<8x16xf32>, vector<16x32xf32>, vector<8x32xf32> -> vector<8x32xf32>
    %c3 = arith.constant 3 : index
    %c0_29 = arith.constant 0 : index
    %26 = vector.load %arg16[%c3, %c0_29] : memref<9x32xf32, #tpu.memory_space<vmem>>, vector<1x32xf32>
    %27 = vector.broadcast %26 : vector<1x32xf32> to vector<8x32xf32>
    %28 = arith.addf %25, %27 : vector<8x32xf32>
    %cst_30 = arith.constant 0.000000e+00 : f32
    %29 = vector.broadcast %cst_30 : f32 to vector<8x32xf32>
    %30 = arith.maximumf %28, %29 : vector<8x32xf32>
    %c0_31 = arith.constant 0 : index
    %c0_32 = arith.constant 0 : index
    %31 = vector.load %arg10[%c0_31, %c0_32] : memref<32x32xf32, #tpu.memory_space<vmem>>, vector<32x32xf32>
    %cst_33 = arith.constant dense<0.000000e+00> : vector<8x32xf32>
    %32 = tpu.matmul %30, %31, %cst_33 {dimension_numbers = #tpu.dot_dimension_numbers<[1], [0], [0], [1], [0, 0, 1, 1], [], []>} : vector<8x32xf32>, vector<32x32xf32>, vector<8x32xf32> -> vector<8x32xf32>
    %c4 = arith.constant 4 : index
    %c0_34 = arith.constant 0 : index
    %33 = vector.load %arg16[%c4, %c0_34] : memref<9x32xf32, #tpu.memory_space<vmem>>, vector<1x32xf32>
    %34 = vector.broadcast %33 : vector<1x32xf32> to vector<8x32xf32>
    %35 = arith.addf %32, %34 : vector<8x32xf32>
    %cst_35 = arith.constant 0.000000e+00 : f32
    %36 = vector.broadcast %cst_35 : f32 to vector<8x32xf32>
    %37 = arith.maximumf %35, %36 : vector<8x32xf32>
    %c0_36 = arith.constant 0 : index
    %c0_37 = arith.constant 0 : index
    %38 = vector.load %arg11[%c0_36, %c0_37] : memref<32x32xf32, #tpu.memory_space<vmem>>, vector<32x32xf32>
    %cst_38 = arith.constant dense<0.000000e+00> : vector<8x32xf32>
    %39 = tpu.matmul %37, %38, %cst_38 {dimension_numbers = #tpu.dot_dimension_numbers<[1], [0], [0], [1], [0, 0, 1, 1], [], []>} : vector<8x32xf32>, vector<32x32xf32>, vector<8x32xf32> -> vector<8x32xf32>
    %c5 = arith.constant 5 : index
    %c0_39 = arith.constant 0 : index
    %40 = vector.load %arg16[%c5, %c0_39] : memref<9x32xf32, #tpu.memory_space<vmem>>, vector<1x32xf32>
    %41 = vector.broadcast %40 : vector<1x32xf32> to vector<8x32xf32>
    %42 = arith.addf %39, %41 : vector<8x32xf32>
    %c0_40 = arith.constant 0 : index
    %c0_41 = arith.constant 0 : index
    %43 = vector.load %arg12[%c0_40, %c0_41] : memref<32x32xf32, #tpu.memory_space<vmem>>, vector<32x32xf32>
    %c0_42 = arith.constant 0 : index
    %c0_43 = arith.constant 0 : index
    %44 = vector.load %arg13[%c0_42, %c0_43] : memref<32x32xf32, #tpu.memory_space<vmem>>, vector<32x32xf32>
    %cst_44 = arith.constant dense<0.000000e+00> : vector<8x32xf32>
    %45 = tpu.matmul %23, %43, %cst_44 {dimension_numbers = #tpu.dot_dimension_numbers<[1], [0], [0], [1], [0, 0, 1, 1], [], []>} : vector<8x32xf32>, vector<32x32xf32>, vector<8x32xf32> -> vector<8x32xf32>
    %cst_45 = arith.constant dense<0.000000e+00> : vector<8x32xf32>
    %46 = tpu.matmul %42, %44, %cst_45 {dimension_numbers = #tpu.dot_dimension_numbers<[1], [0], [0], [1], [0, 0, 1, 1], [], []>} : vector<8x32xf32>, vector<32x32xf32>, vector<8x32xf32> -> vector<8x32xf32>
    %47 = arith.addf %45, %46 : vector<8x32xf32>
    %c6 = arith.constant 6 : index
    %c0_46 = arith.constant 0 : index
    %48 = vector.load %arg16[%c6, %c0_46] : memref<9x32xf32, #tpu.memory_space<vmem>>, vector<1x32xf32>
    %49 = vector.broadcast %48 : vector<1x32xf32> to vector<8x32xf32>
    %50 = arith.addf %47, %49 : vector<8x32xf32>
    %51 = vector.shape_cast %50 : vector<8x32xf32> to vector<1x8x32xf32>
    %52 = vector.broadcast %4 : vector<8x1x32xf32> to vector<8x8x32xf32>
    %53 = vector.broadcast %51 : vector<1x8x32xf32> to vector<8x8x32xf32>
    %54 = arith.addf %52, %53 : vector<8x8x32xf32>
    %55 = vector.shape_cast %54 : vector<8x8x32xf32> to vector<64x32xf32>
    %cst_47 = arith.constant 0.000000e+00 : f32
    %56 = vector.broadcast %cst_47 : f32 to vector<64x32xf32>
    %57 = arith.maximumf %55, %56 : vector<64x32xf32>
    %c0_48 = arith.constant 0 : index
    %c0_49 = arith.constant 0 : index
    %58 = vector.load %arg14[%c0_48, %c0_49] : memref<32x32xf32, #tpu.memory_space<vmem>>, vector<32x32xf32>
    %cst_50 = arith.constant dense<0.000000e+00> : vector<64x32xf32>
    %59 = tpu.matmul %57, %58, %cst_50 {dimension_numbers = #tpu.dot_dimension_numbers<[1], [0], [0], [1], [0, 0, 1, 1], [], []>} : vector<64x32xf32>, vector<32x32xf32>, vector<64x32xf32> -> vector<64x32xf32>
    %c7 = arith.constant 7 : index
    %c0_51 = arith.constant 0 : index
    %60 = vector.load %arg16[%c7, %c0_51] : memref<9x32xf32, #tpu.memory_space<vmem>>, vector<1x32xf32>
    %61 = vector.broadcast %60 : vector<1x32xf32> to vector<64x32xf32>
    %62 = arith.addf %59, %61 : vector<64x32xf32>
    %cst_52 = arith.constant 0.000000e+00 : f32
    %63 = vector.broadcast %cst_52 : f32 to vector<64x32xf32>
    %64 = arith.maximumf %62, %63 : vector<64x32xf32>
    %c0_53 = arith.constant 0 : index
    %c0_54 = arith.constant 0 : index
    %65 = vector.load %arg15[%c0_53, %c0_54] : memref<32x16xf32, #tpu.memory_space<vmem>>, vector<32x16xf32>
    %cst_55 = arith.constant dense<0.000000e+00> : vector<64x16xf32>
    %66 = tpu.matmul %64, %65, %cst_55 {dimension_numbers = #tpu.dot_dimension_numbers<[1], [0], [0], [1], [0, 0, 1, 1], [], []>} : vector<64x32xf32>, vector<32x16xf32>, vector<64x16xf32> -> vector<64x16xf32>
    %c8 = arith.constant 8 : index
    %c0_56 = arith.constant 0 : index
    %67 = vector.load %arg16[%c8, %c0_56] : memref<9x32xf32, #tpu.memory_space<vmem>>, vector<1x16xf32>
    %68 = vector.broadcast %67 : vector<1x16xf32> to vector<64x16xf32>
    %69 = arith.addf %66, %68 : vector<64x16xf32>
    %70 = vector.shape_cast %69 : vector<64x16xf32> to vector<8x8x16xf32>
    %cst_57 = arith.constant 1.000000e+00 : f32
    %71 = vector.broadcast %cst_57 : f32 to vector<8x1x1xf32>
    %72 = arith.subf %71, %2 : vector<8x1x1xf32>
    %73 = vector.shape_cast %0 : vector<8x16xf32> to vector<1x8x16xf32>
    %74 = vector.broadcast %72 : vector<8x1x1xf32> to vector<8x8x16xf32>
    %75 = vector.broadcast %73 : vector<1x8x16xf32> to vector<8x8x16xf32>
    %76 = arith.mulf %74, %75 : vector<8x8x16xf32>
    %77 = vector.shape_cast %1 : vector<8x16xf32> to vector<1x8x16xf32>
    %78 = vector.broadcast %2 : vector<8x1x1xf32> to vector<8x8x16xf32>
    %79 = vector.broadcast %77 : vector<1x8x16xf32> to vector<8x8x16xf32>
    %80 = arith.mulf %78, %79 : vector<8x8x16xf32>
    %81 = arith.addf %76, %80 : vector<8x8x16xf32>
    %82 = vector.broadcast %3 : vector<8x1x1xf32> to vector<8x8x16xf32>
    %83 = arith.mulf %70, %82 : vector<8x8x16xf32>
    %84 = arith.addf %83, %81 : vector<8x8x16xf32>
    %c0_58 = arith.constant 0 : index
    %c0_59 = arith.constant 0 : index
    %c0_60 = arith.constant 0 : index
    %85 = vector.load %arg17[%c0_58, %c0_59, %c0_60] : memref<8x8x16xf32, #tpu.memory_space<vmem>>, vector<8x8x16xf32>
    tpu.vector_store %arg17[%c0_58, %c0_59, %c0_60], %84 {strides = array<i32>} : memref<8x8x16xf32, #tpu.memory_space<vmem>>, vector<8x8x16xf32>,
    return
  }
  func.func @transform_0(%arg0: i32) -> (i32, i32) {
    %c0_i32 = arith.constant 0 : i32
    %c0_i32_0 = arith.constant 0 : i32
    return %arg0, %c0_i32 : i32, i32
  }
  func.func @transform_1(%arg0: i32) -> (i32, i32) {
    %c0_i32 = arith.constant 0 : i32
    %c0_i32_0 = arith.constant 0 : i32
    return %arg0, %c0_i32 : i32, i32
  }
  func.func @transform_2(%arg0: i32) -> (i32, i32, i32) {
    %c0_i32 = arith.constant 0 : i32
    %c0_i32_0 = arith.constant 0 : i32
    %c0_i32_1 = arith.constant 0 : i32
    %c0_i32_2 = arith.constant 0 : i32
    return %c0_i32, %c0_i32_0, %c0_i32_1 : i32, i32, i32
  }
  func.func @transform_3(%arg0: i32) -> (i32, i32, i32) {
    %c0_i32 = arith.constant 0 : i32
    %c0_i32_0 = arith.constant 0 : i32
    %c0_i32_1 = arith.constant 0 : i32
    %c0_i32_2 = arith.constant 0 : i32
    return %c0_i32, %c0_i32_0, %c0_i32_1 : i32, i32, i32
  }
  func.func @transform_4(%arg0: i32) -> (i32, i32, i32) {
    %c0_i32 = arith.constant 0 : i32
    %c0_i32_0 = arith.constant 0 : i32
    %c0_i32_1 = arith.constant 0 : i32
    %c0_i32_2 = arith.constant 0 : i32
    return %c0_i32, %c0_i32_0, %c0_i32_1 : i32, i32, i32
  }
  func.func @transform_5(%arg0: i32) -> (i32, i32) {
    %c0_i32 = arith.constant 0 : i32
    %c0_i32_0 = arith.constant 0 : i32
    %c0_i32_1 = arith.constant 0 : i32
    return %c0_i32, %c0_i32_0 : i32, i32
  }
  func.func @transform_6(%arg0: i32) -> (i32, i32) {
    %c0_i32 = arith.constant 0 : i32
    %c0_i32_0 = arith.constant 0 : i32
    %c0_i32_1 = arith.constant 0 : i32
    return %c0_i32, %c0_i32_0 : i32, i32
  }
  func.func @transform_7(%arg0: i32) -> (i32, i32) {
    %c0_i32 = arith.constant 0 : i32
    %c0_i32_0 = arith.constant 0 : i32
    %c0_i32_1 = arith.constant 0 : i32
    return %c0_i32, %c0_i32_0 : i32, i32
  }
  func.func @transform_8(%arg0: i32) -> (i32, i32) {
    %c0_i32 = arith.constant 0 : i32
    %c0_i32_0 = arith.constant 0 : i32
    %c0_i32_1 = arith.constant 0 : i32
    return %c0_i32, %c0_i32_0 : i32, i32
  }
  func.func @transform_9(%arg0: i32) -> (i32, i32) {
    %c0_i32 = arith.constant 0 : i32
    %c0_i32_0 = arith.constant 0 : i32
    %c0_i32_1 = arith.constant 0 : i32
    return %c0_i32, %c0_i32_0 : i32, i32
  }
  func.func @transform_10(%arg0: i32) -> (i32, i32) {
    %c0_i32 = arith.constant 0 : i32
    %c0_i32_0 = arith.constant 0 : i32
    %c0_i32_1 = arith.constant 0 : i32
    return %c0_i32, %c0_i32_0 : i32, i32
  }
  func.func @transform_11(%arg0: i32) -> (i32, i32) {
    %c0_i32 = arith.constant 0 : i32
    %c0_i32_0 = arith.constant 0 : i32
    %c0_i32_1 = arith.constant 0 : i32
    return %c0_i32, %c0_i32_0 : i32, i32
  }
  func.func @transform_12(%arg0: i32) -> (i32, i32) {
    %c0_i32 = arith.constant 0 : i32
    %c0_i32_0 = arith.constant 0 : i32
    %c0_i32_1 = arith.constant 0 : i32
    return %c0_i32, %c0_i32_0 : i32, i32
  }
  func.func @transform_13(%arg0: i32) -> (i32, i32) {
    %c0_i32 = arith.constant 0 : i32
    %c0_i32_0 = arith.constant 0 : i32
    %c0_i32_1 = arith.constant 0 : i32
    return %c0_i32, %c0_i32_0 : i32, i32
  }
  func.func @transform_14(%arg0: i32) -> (i32, i32) {
    %c0_i32 = arith.constant 0 : i32
    %c0_i32_0 = arith.constant 0 : i32
    %c0_i32_1 = arith.constant 0 : i32
    return %c0_i32, %c0_i32_0 : i32, i32
  }
  func.func @transform_15(%arg0: i32) -> (i32, i32) {
    %c0_i32 = arith.constant 0 : i32
    %c0_i32_0 = arith.constant 0 : i32
    %c0_i32_1 = arith.constant 0 : i32
    return %c0_i32, %c0_i32_0 : i32, i32
  }
  func.func @transform_16(%arg0: i32) -> (i32, i32, i32) {
    %c0_i32 = arith.constant 0 : i32
    %c0_i32_0 = arith.constant 0 : i32
    %c0_i32_1 = arith.constant 0 : i32
    return %c0_i32, %arg0, %c0_i32_0 : i32, i32, i32
  }
}

</mosaic_0001>

<llo_original>
// kernel: tpu_custom_call.1
$region0: #{tpu_custom_call.1}
  #allocation0 [shape = 'u32[]', space=smem, size = 0x4, offset = 0x4, fixed_abs, tag = 'smem constant byte address 0x4 - core index']
  #allocation1 [shape = 'u32[144,128]{1,0:T(1,128)}', space=vmem, size = 0x12000, scoped, tag = 'internal scratch']
  %s0 = inlined_call_operand.vmem [shape: f32[24,16], index: 0, kind: input, shape index: {}]
  %s1 = inlined_call_operand.vmem [shape: f32[24,16], index: 1, kind: input, shape index: {}]
  %s2 = inlined_call_operand.vmem [shape: f32[8,1,1], index: 2, kind: input, shape index: {}]
  %s3 = inlined_call_operand.vmem [shape: f32[8,1,1], index: 3, kind: input, shape index: {}]
  %s4 = inlined_call_operand.hbm [shape: f32[8,1,32], index: 4, kind: input, shape index: {}]
  %s5 = inlined_call_operand.hbm [shape: f32[16,32], index: 5, kind: input, shape index: {}]
  %s6 = inlined_call_operand.vmem [shape: f32[32,32], index: 6, kind: input, shape index: {}]
  %s7 = inlined_call_operand.vmem [shape: f32[32,32], index: 7, kind: input, shape index: {}]
  %s8 = inlined_call_operand.hbm [shape: f32[16,32], index: 8, kind: input, shape index: {}]
  %s9 = inlined_call_operand.vmem [shape: f32[32,32], index: 9, kind: input, shape index: {}]
  %s10 = inlined_call_operand.vmem [shape: f32[32,32], index: 10, kind: input, shape index: {}]
  %s11 = inlined_call_operand.vmem [shape: f32[32,32], index: 11, kind: input, shape index: {}]
  %s12 = inlined_call_operand.hbm [shape: f32[32,32], index: 12, kind: input, shape index: {}]
  %s13 = inlined_call_operand.vmem [shape: f32[32,32], index: 13, kind: input, shape index: {}]
  %s14 = inlined_call_operand.vmem [shape: f32[32,16], index: 14, kind: input, shape index: {}]
  %s15 = inlined_call_operand.hbm [shape: f32[9,32], index: 15, kind: input, shape index: {}]
  %s16 = inlined_call_operand.vmem [shape: f32[8,24,16], index: 16, kind: output, shape index: {}]
  %s17 = sld [smem:[#allocation0]]
  $region151: #{tpu_custom_call.1} parent=0
    _
  %s19 = ssub.s32 1, %s17
  %s20 = scalar_select 0, %s19, %s17
  $region1: #{tpu_custom_call.1} parent=0
    #allocation2 [shape = 'u8[4096]{0}', space=vmem, size = 0x1000, scoped, tag = 'input window, operand 4, single buffered']
    #allocation3 [shape = 's32[2]{0}', space=sflag, size = 0x8, scoped, tag = 'scoped memory for tpu_custom_call.1']
    #allocation4 [shape = 'u8[8192]{0}', space=vmem, size = 0x2000, scoped, tag = 'input window, operand 5, single buffered']
    #allocation5 [shape = 's32[1]{0}', space=sflag, size = 0x4, scoped, tag = 'scoped memory for tpu_custom_call.1']
    #allocation6 [shape = 'u8[8192]{0}', space=vmem, size = 0x2000, scoped, tag = 'input window, operand 8, single buffered']
    #allocation7 [shape = 'u8[16384]{0}', space=vmem, size = 0x4000, scoped, tag = 'input window, operand 12, single buffered']
    #allocation8 [shape = 's32[1]{0}', space=sflag, size = 0x4, scoped, tag = 'scoped memory for tpu_custom_call.1']
    #allocation9 [shape = 'u8[8192]{0}', space=vmem, size = 0x2000, scoped, tag = 'input window, operand 15, single buffered']
    #allocation10 [shape = 'u8[65536]{0}', space=vmem, size = 0x10000, scoped, tag = 'output window, operand 0']
    %21 = vsyncpa [#allocation3], 0
    %22 = vsyncpa [#allocation5], 0
    %23 = vsyncpa [#allocation8], 0
    loop: start=0, step=1, limit=5
    $region2: #{tpu_custom_call.1} parent=1 // loop_pre_header
      _
    $region3: #{tpu_custom_call.1} parent=1 // loop_header
      %s25 = sphi 0, %s29
      %p26 = scmp.ge.s32.totalorder %s25, 5
      %s35 = sphi 0, %s37
      %s38 = sphi 0, %s35
      %s39 = sphi 0, %s38
      %s55 = sphi 0, %s39
      %s61 = sphi 0, %s63
      %s64 = sphi 0, %s61
      %s65 = sphi 0, %s64
      %s81 = sphi 0, %s65
      %s85 = sphi 0, %s85
      %s87 = sphi 0, %s85
      %s88 = sphi 0, %s87
      %s102 = sphi 0, %s88
      %s106 = sphi 0, %s106
      %s108 = sphi 0, %s106
      %s109 = sphi 0, %s108
      %s123 = sphi 0, %s109
      %s127 = sphi 0, %s127
      %s129 = sphi 0, %s127
      %s130 = sphi 0, %s129
      %s144 = sphi 0, %s130
      %s148 = sphi 0, %s148
      %s150 = sphi 0, %s148
      %s151 = sphi 0, %s150
      %s165 = sphi 0, %s151
      %s169 = sphi 0, %s169
      %s171 = sphi 0, %s169
      %s172 = sphi 0, %s171
      %s186 = sphi 0, %s172
      %s190 = sphi 0, %s190
      %s192 = sphi 0, %s190
      %s193 = sphi 0, %s192
      %s207 = sphi 0, %s193
      %s211 = sphi 0, %s211
      %s213 = sphi 0, %s211
      %s214 = sphi 0, %s213
      %s228 = sphi 0, %s214
      %s232 = sphi 0, %s232
      %s234 = sphi 0, %s232
      %s235 = sphi 0, %s234
      %s249 = sphi 0, %s235
      %s253 = sphi 0, %s253
      %s255 = sphi 0, %s253
      %s256 = sphi 0, %s255
      %s270 = sphi 0, %s256
      %s274 = sphi 0, %s274
      %s276 = sphi 0, %s274
      %s277 = sphi 0, %s276
      %s291 = sphi 0, %s277
      %s295 = sphi 0, %s295
      %s297 = sphi 0, %s295
      %s298 = sphi 0, %s297
      %s312 = sphi 0, %s298
      %s316 = sphi 0, %s316
      %s318 = sphi 0, %s316
      %s319 = sphi 0, %s318
      %s333 = sphi 0, %s319
      %s337 = sphi 0, %s337
      %s339 = sphi 0, %s337
      %s340 = sphi 0, %s339
      %s354 = sphi 0, %s340
      %s358 = sphi 0, %s358
      %s360 = sphi 0, %s358
      %s361 = sphi 0, %s360
      %s375 = sphi 0, %s361
      %s381 = sphi 0, %s383
      %s384 = sphi 0, %s381
      %s385 = sphi 0, %s384
      %s401 = sphi 0, %s385
    $region4: #{tpu_custom_call.1} parent=1 // loop_header_branch
      %28 = sbr.rel (%p26) target = $region8
    $region5: #{tpu_custom_call.1} parent=1 // loop_body
      %s30 = ssub.s32 %s25, 1
      %s31 = ssub.s32 %s25, 2
      %s32 = sadd.s32 %s25, 1
      %s33 = ssub.s32 %s25, %s32
      %p34 = scmp.eq.s32.totalorder %s33, 0
      %s36 = sadd.s32 %s35, 1
      %s37 = scalar_select %p34, %s35, %s36
      %p40 = pneg %p34
      %p41 = scmp.eq.s32.totalorder %s25, 2
      %p42 = por %p40, %p41
      %p43 = scmp.ne.s32.totalorder %s35, %s38
      %p44 = scmp.eq.s32.totalorder %s25, 0
      %p45 = por %p43, %p44
      %p46 = scmp.ne.s32.totalorder %s35, %s38
      %p47 = scmp.eq.s32.totalorder %s30, 2
      %p48 = por %p46, %p47
      %p49 = scmp.ne.s32.totalorder %s38, %s39
      %p50 = scmp.eq.s32.totalorder %s30, 0
      %p51 = por %p49, %p50
      %p52 = scmp.ne.s32.totalorder %s38, %s39
      %p53 = scmp.eq.s32.totalorder %s31, 2
      %p54 = por %p52, %p53
      %p56 = scmp.ne.s32.totalorder %s39, %s55
      %p57 = scmp.eq.s32.totalorder %s31, 0
      %p58 = por %p56, %p57
      %s59 = ssub.s32 %s25, %s32
      %p60 = scmp.eq.s32.totalorder %s59, 0
      %s62 = sadd.s32 %s61, 1
      %s63 = scalar_select %p60, %s61, %s62
      %p66 = pneg %p60
      %p67 = scmp.eq.s32.totalorder %s25, 2
      %p68 = por %p66, %p67
      %p69 = scmp.ne.s32.totalorder %s61, %s64
      %p70 = scmp.eq.s32.totalorder %s25, 0
      %p71 = por %p69, %p70
      %p72 = scmp.ne.s32.totalorder %s61, %s64
      %p73 = scmp.eq.s32.totalorder %s30, 2
      %p74 = por %p72, %p73
      %p75 = scmp.ne.s32.totalorder %s64, %s65
      %p76 = scmp.eq.s32.totalorder %s30, 0
      %p77 = por %p75, %p76
      %p78 = scmp.ne.s32.totalorder %s64, %s65
      %p79 = scmp.eq.s32.totalorder %s31, 2
      %p80 = por %p78, %p79
      %p82 = scmp.ne.s32.totalorder %s65, %s81
      %p83 = scmp.eq.s32.totalorder %s31, 0
      %p84 = por %p82, %p83
      %s86 = sadd.s32 %s85, 1
      %p89 = scmp.eq.s32.totalorder %s25, 2
      %p90 = scmp.ne.s32.totalorder %s85, %s87
      %p91 = scmp.eq.s32.totalorder %s25, 0
      %p92 = por %p90, %p91
      %p93 = scmp.ne.s32.totalorder %s85, %s87
      %p94 = scmp.eq.s32.totalorder %s30, 2
      %p95 = por %p93, %p94
      %p96 = scmp.ne.s32.totalorder %s87, %s88
      %p97 = scmp.eq.s32.totalorder %s30, 0
      %p98 = por %p96, %p97
      %p99 = scmp.ne.s32.totalorder %s87, %s88
      %p100 = scmp.eq.s32.totalorder %s31, 2
      %p101 = por %p99, %p100
      %p103 = scmp.ne.s32.totalorder %s88, %s102
      %p104 = scmp.eq.s32.totalorder %s31, 0
      %p105 = por %p103, %p104
      %s107 = sadd.s32 %s106, 1
      %p110 = scmp.eq.s32.totalorder %s25, 2
      %p111 = scmp.ne.s32.totalorder %s106, %s108
      %p112 = scmp.eq.s32.totalorder %s25, 0
      %p113 = por %p111, %p112
      %p114 = scmp.ne.s32.totalorder %s106, %s108
      %p115 = scmp.eq.s32.totalorder %s30, 2
      %p116 = por %p114, %p115
      %p117 = scmp.ne.s32.totalorder %s108, %s109
      %p118 = scmp.eq.s32.totalorder %s30, 0
      %p119 = por %p117, %p118
      %p120 = scmp.ne.s32.totalorder %s108, %s109
      %p121 = scmp.eq.s32.totalorder %s31, 2
      %p122 = por %p120, %p121
      %p124 = scmp.ne.s32.totalorder %s109, %s123
      %p125 = scmp.eq.s32.totalorder %s31, 0
      %p126 = por %p124, %p125
      %s128 = sadd.s32 %s127, 1
      %p131 = scmp.eq.s32.totalorder %s25, 2
      %p132 = scmp.ne.s32.totalorder %s127, %s129
      %p133 = scmp.eq.s32.totalorder %s25, 0
      %p134 = por %p132, %p133
      %p135 = scmp.ne.s32.totalorder %s127, %s129
      %p136 = scmp.eq.s32.totalorder %s30, 2
      %p137 = por %p135, %p136
      %p138 = scmp.ne.s32.totalorder %s129, %s130
      %p139 = scmp.eq.s32.totalorder %s30, 0
      %p140 = por %p138, %p139
      %p141 = scmp.ne.s32.totalorder %s129, %s130
      %p142 = scmp.eq.s32.totalorder %s31, 2
      %p143 = por %p141, %p142
      %p145 = scmp.ne.s32.totalorder %s130, %s144
      %p146 = scmp.eq.s32.totalorder %s31, 0
      %p147 = por %p145, %p146
      %s149 = sadd.s32 %s148, 1
      %p152 = scmp.eq.s32.totalorder %s25, 2
      %p153 = scmp.ne.s32.totalorder %s148, %s150
      %p154 = scmp.eq.s32.totalorder %s25, 0
      %p155 = por %p153, %p154
      %p156 = scmp.ne.s32.totalorder %s148, %s150
      %p157 = scmp.eq.s32.totalorder %s30, 2
      %p158 = por %p156, %p157
      %p159 = scmp.ne.s32.totalorder %s150, %s151
      %p160 = scmp.eq.s32.totalorder %s30, 0
      %p161 = por %p159, %p160
      %p162 = scmp.ne.s32.totalorder %s150, %s151
      %p163 = scmp.eq.s32.totalorder %s31, 2
      %p164 = por %p162, %p163
      %p166 = scmp.ne.s32.totalorder %s151, %s165
      %p167 = scmp.eq.s32.totalorder %s31, 0
      %p168 = por %p166, %p167
      %s170 = sadd.s32 %s169, 1
      %p173 = scmp.eq.s32.totalorder %s25, 2
      %p174 = scmp.ne.s32.totalorder %s169, %s171
      %p175 = scmp.eq.s32.totalorder %s25, 0
      %p176 = por %p174, %p175
      %p177 = scmp.ne.s32.totalorder %s169, %s171
      %p178 = scmp.eq.s32.totalorder %s30, 2
      %p179 = por %p177, %p178
      %p180 = scmp.ne.s32.totalorder %s171, %s172
      %p181 = scmp.eq.s32.totalorder %s30, 0
      %p182 = por %p180, %p181
      %p183 = scmp.ne.s32.totalorder %s171, %s172
      %p184 = scmp.eq.s32.totalorder %s31, 2
      %p185 = por %p183, %p184
      %p187 = scmp.ne.s32.totalorder %s172, %s186
      %p188 = scmp.eq.s32.totalorder %s31, 0
      %p189 = por %p187, %p188
      %s191 = sadd.s32 %s190, 1
      %p194 = scmp.eq.s32.totalorder %s25, 2
      %p195 = scmp.ne.s32.totalorder %s190, %s192
      %p196 = scmp.eq.s32.totalorder %s25, 0
      %p197 = por %p195, %p196
      %p198 = scmp.ne.s32.totalorder %s190, %s192
      %p199 = scmp.eq.s32.totalorder %s30, 2
      %p200 = por %p198, %p199
      %p201 = scmp.ne.s32.totalorder %s192, %s193
      %p202 = scmp.eq.s32.totalorder %s30, 0
      %p203 = por %p201, %p202
      %p204 = scmp.ne.s32.totalorder %s192, %s193
      %p205 = scmp.eq.s32.totalorder %s31, 2
      %p206 = por %p204, %p205
      %p208 = scmp.ne.s32.totalorder %s193, %s207
      %p209 = scmp.eq.s32.totalorder %s31, 0
      %p210 = por %p208, %p209
      %s212 = sadd.s32 %s211, 1
      %p215 = scmp.eq.s32.totalorder %s25, 2
      %p216 = scmp.ne.s32.totalorder %s211, %s213
      %p217 = scmp.eq.s32.totalorder %s25, 0
      %p218 = por %p216, %p217
      %p219 = scmp.ne.s32.totalorder %s211, %s213
      %p220 = scmp.eq.s32.totalorder %s30, 2
      %p221 = por %p219, %p220
      %p222 = scmp.ne.s32.totalorder %s213, %s214
      %p223 = scmp.eq.s32.totalorder %s30, 0
      %p224 = por %p222, %p223
      %p225 = scmp.ne.s32.totalorder %s213, %s214
      %p226 = scmp.eq.s32.totalorder %s31, 2
      %p227 = por %p225, %p226
      %p229 = scmp.ne.s32.totalorder %s214, %s228
      %p230 = scmp.eq.s32.totalorder %s31, 0
      %p231 = por %p229, %p230
      %s233 = sadd.s32 %s232, 1
      %p236 = scmp.eq.s32.totalorder %s25, 2
      %p237 = scmp.ne.s32.totalorder %s232, %s234
      %p238 = scmp.eq.s32.totalorder %s25, 0
      %p239 = por %p237, %p238
      %p240 = scmp.ne.s32.totalorder %s232, %s234
      %p241 = scmp.eq.s32.totalorder %s30, 2
      %p242 = por %p240, %p241
      %p243 = scmp.ne.s32.totalorder %s234, %s235
      %p244 = scmp.eq.s32.totalorder %s30, 0
      %p245 = por %p243, %p244
      %p246 = scmp.ne.s32.totalorder %s234, %s235
      %p247 = scmp.eq.s32.totalorder %s31, 2
      %p248 = por %p246, %p247
      %p250 = scmp.ne.s32.totalorder %s235, %s249
      %p251 = scmp.eq.s32.totalorder %s31, 0
      %p252 = por %p250, %p251
      %s254 = sadd.s32 %s253, 1
      %p257 = scmp.eq.s32.totalorder %s25, 2
      %p258 = scmp.ne.s32.totalorder %s253, %s255
      %p259 = scmp.eq.s32.totalorder %s25, 0
      %p260 = por %p258, %p259
      %p261 = scmp.ne.s32.totalorder %s253, %s255
      %p262 = scmp.eq.s32.totalorder %s30, 2
      %p263 = por %p261, %p262
      %p264 = scmp.ne.s32.totalorder %s255, %s256
      %p265 = scmp.eq.s32.totalorder %s30, 0
      %p266 = por %p264, %p265
      %p267 = scmp.ne.s32.totalorder %s255, %s256
      %p268 = scmp.eq.s32.totalorder %s31, 2
      %p269 = por %p267, %p268
      %p271 = scmp.ne.s32.totalorder %s256, %s270
      %p272 = scmp.eq.s32.totalorder %s31, 0
      %p273 = por %p271, %p272
      %s275 = sadd.s32 %s274, 1
      %p278 = scmp.eq.s32.totalorder %s25, 2
      %p279 = scmp.ne.s32.totalorder %s274, %s276
      %p280 = scmp.eq.s32.totalorder %s25, 0
      %p281 = por %p279, %p280
      %p282 = scmp.ne.s32.totalorder %s274, %s276
      %p283 = scmp.eq.s32.totalorder %s30, 2
      %p284 = por %p282, %p283
      %p285 = scmp.ne.s32.totalorder %s276, %s277
      %p286 = scmp.eq.s32.totalorder %s30, 0
      %p287 = por %p285, %p286
      %p288 = scmp.ne.s32.totalorder %s276, %s277
      %p289 = scmp.eq.s32.totalorder %s31, 2
      %p290 = por %p288, %p289
      %p292 = scmp.ne.s32.totalorder %s277, %s291
      %p293 = scmp.eq.s32.totalorder %s31, 0
      %p294 = por %p292, %p293
      %s296 = sadd.s32 %s295, 1
      %p299 = scmp.eq.s32.totalorder %s25, 2
      %p300 = scmp.ne.s32.totalorder %s295, %s297
      %p301 = scmp.eq.s32.totalorder %s25, 0
      %p302 = por %p300, %p301
      %p303 = scmp.ne.s32.totalorder %s295, %s297
      %p304 = scmp.eq.s32.totalorder %s30, 2
      %p305 = por %p303, %p304
      %p306 = scmp.ne.s32.totalorder %s297, %s298
      %p307 = scmp.eq.s32.totalorder %s30, 0
      %p308 = por %p306, %p307
      %p309 = scmp.ne.s32.totalorder %s297, %s298
      %p310 = scmp.eq.s32.totalorder %s31, 2
      %p311 = por %p309, %p310
      %p313 = scmp.ne.s32.totalorder %s298, %s312
      %p314 = scmp.eq.s32.totalorder %s31, 0
      %p315 = por %p313, %p314
      %s317 = sadd.s32 %s316, 1
      %p320 = scmp.eq.s32.totalorder %s25, 2
      %p321 = scmp.ne.s32.totalorder %s316, %s318
      %p322 = scmp.eq.s32.totalorder %s25, 0
      %p323 = por %p321, %p322
      %p324 = scmp.ne.s32.totalorder %s316, %s318
      %p325 = scmp.eq.s32.totalorder %s30, 2
      %p326 = por %p324, %p325
      %p327 = scmp.ne.s32.totalorder %s318, %s319
      %p328 = scmp.eq.s32.totalorder %s30, 0
      %p329 = por %p327, %p328
      %p330 = scmp.ne.s32.totalorder %s318, %s319
      %p331 = scmp.eq.s32.totalorder %s31, 2
      %p332 = por %p330, %p331
      %p334 = scmp.ne.s32.totalorder %s319, %s333
      %p335 = scmp.eq.s32.totalorder %s31, 0
      %p336 = por %p334, %p335
      %s338 = sadd.s32 %s337, 1
      %p341 = scmp.eq.s32.totalorder %s25, 2
      %p342 = scmp.ne.s32.totalorder %s337, %s339
      %p343 = scmp.eq.s32.totalorder %s25, 0
      %p344 = por %p342, %p343
      %p345 = scmp.ne.s32.totalorder %s337, %s339
      %p346 = scmp.eq.s32.totalorder %s30, 2
      %p347 = por %p345, %p346
      %p348 = scmp.ne.s32.totalorder %s339, %s340
      %p349 = scmp.eq.s32.totalorder %s30, 0
      %p350 = por %p348, %p349
      %p351 = scmp.ne.s32.totalorder %s339, %s340
      %p352 = scmp.eq.s32.totalorder %s31, 2
      %p353 = por %p351, %p352
      %p355 = scmp.ne.s32.totalorder %s340, %s354
      %p356 = scmp.eq.s32.totalorder %s31, 0
      %p357 = por %p355, %p356
      %s359 = sadd.s32 %s358, 1
      %p362 = scmp.eq.s32.totalorder %s25, 2
      %p363 = scmp.ne.s32.totalorder %s358, %s360
      %p364 = scmp.eq.s32.totalorder %s25, 0
      %p365 = por %p363, %p364
      %p366 = scmp.ne.s32.totalorder %s358, %s360
      %p367 = scmp.eq.s32.totalorder %s30, 2
      %p368 = por %p366, %p367
      %p369 = scmp.ne.s32.totalorder %s360, %s361
      %p370 = scmp.eq.s32.totalorder %s30, 0
      %p371 = por %p369, %p370
      %p372 = scmp.ne.s32.totalorder %s360, %s361
      %p373 = scmp.eq.s32.totalorder %s31, 2
      %p374 = por %p372, %p373
      %p376 = scmp.ne.s32.totalorder %s361, %s375
      %p377 = scmp.eq.s32.totalorder %s31, 0
      %p378 = por %p376, %p377
      %s379 = ssub.s32 %s25, %s32
      %p380 = scmp.eq.s32.totalorder %s379, 0
      %s382 = sadd.s32 %s381, 1
      %s383 = scalar_select %p380, %s381, %s382
      %p386 = pneg %p380
      %p387 = scmp.eq.s32.totalorder %s25, 2
      %p388 = por %p386, %p387
      %p389 = scmp.ne.s32.totalorder %s381, %s384
      %p390 = scmp.eq.s32.totalorder %s25, 0
      %p391 = por %p389, %p390
      %p392 = scmp.ne.s32.totalorder %s381, %s384
      %p393 = scmp.eq.s32.totalorder %s30, 2
      %p394 = por %p392, %p393
      %p395 = scmp.ne.s32.totalorder %s384, %s385
      %p396 = scmp.eq.s32.totalorder %s30, 0
      %p397 = por %p395, %p396
      %p398 = scmp.ne.s32.totalorder %s384, %s385
      %p399 = scmp.eq.s32.totalorder %s31, 2
      %p400 = por %p398, %p399
      %p402 = scmp.ne.s32.totalorder %s385, %s401
      %p403 = scmp.eq.s32.totalorder %s31, 0
      %p404 = por %p402, %p403
      %p405 = scmp.le.s32.totalorder 1, %s25
      %p406 = scmp.lt.s32.totalorder %s25, 4
      %p407 = pnand %p405, %p406
      %p408 = pneg %p407
      // Predicated region
      $region9: #{tpu_custom_call.1} parent=5 // pred_check
        _
      $region10: #{tpu_custom_call.1} parent=5 // pred_check_branch
        %410 = sbr.rel (%p407) target = $region12
      $region11: #{tpu_custom_call.1} parent=5 // pred_region
        %s411 = ssub.s32 %s25, 1
        // Predicated region
        $region13: #{tpu_custom_call.1} parent=11 // pred_check
          %p412 = pneg %p98
        $region14: #{tpu_custom_call.1} parent=11 // pred_check_branch
          %414 = sbr.rel (%p412) target = $region16
        $region15: #{tpu_custom_call.1} parent=11 // pred_region
          _
        $region16: #{tpu_custom_call.1} parent=11 // pred_fallthru
          _
        // Predicated region
        $region17: #{tpu_custom_call.1} parent=11 // pred_check
          %p415 = pneg %p119
        $region18: #{tpu_custom_call.1} parent=11 // pred_check_branch
          %417 = sbr.rel (%p415) target = $region20
        $region19: #{tpu_custom_call.1} parent=11 // pred_region
          _
        $region20: #{tpu_custom_call.1} parent=11 // pred_fallthru
          _
        // Predicated region
        $region21: #{tpu_custom_call.1} parent=11 // pred_check
          %p418 = pneg %p140
        $region22: #{tpu_custom_call.1} parent=11 // pred_check_branch
          %420 = sbr.rel (%p418) target = $region24
        $region23: #{tpu_custom_call.1} parent=11 // pred_region
          %s422 = ssub.s32 128, 128
          %423 = vsyncadd [#allocation3], %s422
          %s424 = sshll.u32 [#allocation2], 4
          %s425 = int_to_ptr.vmem [resolvable:$true] %s424
          %430 = dma.hbm_to_vmem [thread:$0]  %s4, 128, %s425, [#allocation3], 16, 16, 1
        $region24: #{tpu_custom_call.1} parent=11 // pred_fallthru
          _
        // Predicated region
        $region25: #{tpu_custom_call.1} parent=11 // pred_check
          %p431 = pneg %p161
        $region26: #{tpu_custom_call.1} parent=11 // pred_check_branch
          %433 = sbr.rel (%p431) target = $region28
        $region27: #{tpu_custom_call.1} parent=11 // pred_region
          %s435 = ssub.s32 256, 256
          %436 = vsyncadd [#allocation5], %s435
          %s437 = sshll.u32 [#allocation4], 4
          %s438 = int_to_ptr.vmem [resolvable:$true] %s437
          %443 = dma.hbm_to_vmem [thread:$0]  %s5, 256, %s438, [#allocation5], 128, 128, 8
        $region28: #{tpu_custom_call.1} parent=11 // pred_fallthru
          _
        // Predicated region
        $region29: #{tpu_custom_call.1} parent=11 // pred_check
          %p444 = pneg %p182
        $region30: #{tpu_custom_call.1} parent=11 // pred_check_branch
          %446 = sbr.rel (%p444) target = $region32
        $region31: #{tpu_custom_call.1} parent=11 // pred_region
          _
        $region32: #{tpu_custom_call.1} parent=11 // pred_fallthru
          _
        // Predicated region
        $region33: #{tpu_custom_call.1} parent=11 // pred_check
          %p447 = pneg %p203
        $region34: #{tpu_custom_call.1} parent=11 // pred_check_branch
          %449 = sbr.rel (%p447) target = $region36
        $region35: #{tpu_custom_call.1} parent=11 // pred_region
          _
        $region36: #{tpu_custom_call.1} parent=11 // pred_fallthru
          _
        // Predicated region
        $region37: #{tpu_custom_call.1} parent=11 // pred_check
          %p450 = pneg %p224
        $region38: #{tpu_custom_call.1} parent=11 // pred_check_branch
          %452 = sbr.rel (%p450) target = $region40
        $region39: #{tpu_custom_call.1} parent=11 // pred_region
          %s454 = ssub.s32 256, 256
          %455 = vsyncadd [#allocation5], %s454
          %s456 = sshll.u32 [#allocation6], 4
          %s457 = int_to_ptr.vmem [resolvable:$true] %s456
          %462 = dma.hbm_to_vmem [thread:$0]  %s8, 256, %s457, [#allocation5], 128, 128, 8
        $region40: #{tpu_custom_call.1} parent=11 // pred_fallthru
          _
        // Predicated region
        $region41: #{tpu_custom_call.1} parent=11 // pred_check
          %p463 = pneg %p245
        $region42: #{tpu_custom_call.1} parent=11 // pred_check_branch
          %465 = sbr.rel (%p463) target = $region44
        $region43: #{tpu_custom_call.1} parent=11 // pred_region
          _
        $region44: #{tpu_custom_call.1} parent=11 // pred_fallthru
          _
        // Predicated region
        $region45: #{tpu_custom_call.1} parent=11 // pred_check
          %p466 = pneg %p266
        $region46: #{tpu_custom_call.1} parent=11 // pred_check_branch
          %468 = sbr.rel (%p466) target = $region48
        $region47: #{tpu_custom_call.1} parent=11 // pred_region
          _
        $region48: #{tpu_custom_call.1} parent=11 // pred_fallthru
          _
        // Predicated region
        $region49: #{tpu_custom_call.1} parent=11 // pred_check
          %p469 = pneg %p287
        $region50: #{tpu_custom_call.1} parent=11 // pred_check_branch
          %471 = sbr.rel (%p469) target = $region52
        $region51: #{tpu_custom_call.1} parent=11 // pred_region
          _
        $region52: #{tpu_custom_call.1} parent=11 // pred_fallthru
          _
        // Predicated region
        $region53: #{tpu_custom_call.1} parent=11 // pred_check
          %p472 = pneg %p308
        $region54: #{tpu_custom_call.1} parent=11 // pred_check_branch
          %474 = sbr.rel (%p472) target = $region56
        $region55: #{tpu_custom_call.1} parent=11 // pred_region
          %s476 = ssub.s32 512, 512
          %477 = vsyncadd [#allocation8], %s476
          %s478 = sshll.u32 [#allocation7], 4
          %s479 = int_to_ptr.vmem [resolvable:$true] %s478
          %484 = dma.hbm_to_vmem [thread:$0]  %s12, 512, %s479, [#allocation8], 128, 128, 8
        $region56: #{tpu_custom_call.1} parent=11 // pred_fallthru
          _
        // Predicated region
        $region57: #{tpu_custom_call.1} parent=11 // pred_check
          %p485 = pneg %p329
        $region58: #{tpu_custom_call.1} parent=11 // pred_check_branch
          %487 = sbr.rel (%p485) target = $region60
        $region59: #{tpu_custom_call.1} parent=11 // pred_region
          _
        $region60: #{tpu_custom_call.1} parent=11 // pred_fallthru
          _
        // Predicated region
        $region61: #{tpu_custom_call.1} parent=11 // pred_check
          %p488 = pneg %p350
        $region62: #{tpu_custom_call.1} parent=11 // pred_check_branch
          %490 = sbr.rel (%p488) target = $region64
        $region63: #{tpu_custom_call.1} parent=11 // pred_region
          _
        $region64: #{tpu_custom_call.1} parent=11 // pred_fallthru
          _
        // Predicated region
        $region65: #{tpu_custom_call.1} parent=11 // pred_check
          %p491 = pneg %p371
        $region66: #{tpu_custom_call.1} parent=11 // pred_check_branch
          %493 = sbr.rel (%p491) target = $region68
        $region67: #{tpu_custom_call.1} parent=11 // pred_region
          %s495 = ssub.s32 256, 256
          %496 = vsyncadd [#allocation8], %s495
          %s497 = sshll.u32 [#allocation9], 4
          %s498 = int_to_ptr.vmem [resolvable:$true] %s497
          %503 = dma.hbm_to_vmem [thread:$0]  %s15, 256, %s498, [#allocation8], 128, 128, 8
        $region68: #{tpu_custom_call.1} parent=11 // pred_fallthru
          _
      $region12: #{tpu_custom_call.1} parent=5 // pred_fallthru
        _
      %p504 = scmp.lt.s32.totalorder %s25, 3
      // Predicated region
      $region69: #{tpu_custom_call.1} parent=5 // pred_check
        %p505 = pneg %p504
      $region70: #{tpu_custom_call.1} parent=5 // pred_check_branch
        %507 = sbr.rel (%p505) target = $region72
      $region71: #{tpu_custom_call.1} parent=5 // pred_region
        // Predicated region
        $region73: #{tpu_custom_call.1} parent=71 // pred_check
          %p508 = pneg %p45
        $region74: #{tpu_custom_call.1} parent=71 // pred_check_branch
          %510 = sbr.rel (%p508) target = $region76
        $region75: #{tpu_custom_call.1} parent=71 // pred_region
          %p511 = scmp.lt.s32.totalorder %s25, 2
          %s512 = scalar_select %p511, %s25, 2
          %s513 = smul.addr %s512, 8
          %s514 = scalar_lea.vmem %s0, %s513
        $region76: #{tpu_custom_call.1} parent=71 // pred_fallthru
          _
        // Predicated region
        $region77: #{tpu_custom_call.1} parent=71 // pred_check
          %p515 = pneg %p71
        $region78: #{tpu_custom_call.1} parent=71 // pred_check_branch
          %517 = sbr.rel (%p515) target = $region80
        $region79: #{tpu_custom_call.1} parent=71 // pred_region
          %p518 = scmp.lt.s32.totalorder %s25, 2
          %s519 = scalar_select %p518, %s25, 2
          %s520 = smul.addr %s519, 8
          %s521 = scalar_lea.vmem %s1, %s520
        $region80: #{tpu_custom_call.1} parent=71 // pred_fallthru
          _
      $region72: #{tpu_custom_call.1} parent=5 // pred_fallthru
        _
      %p522 = scmp.le.s32.totalorder 1, %s25
      %p523 = scmp.lt.s32.totalorder %s25, 4
      %p524 = pnand %p522, %p523
      %p525 = pneg %p524
      // Predicated region
      $region81: #{tpu_custom_call.1} parent=5 // pred_check
        _
      $region82: #{tpu_custom_call.1} parent=5 // pred_check_branch
        %527 = sbr.rel (%p524) target = $region84
      $region83: #{tpu_custom_call.1} parent=5 // pred_region
        %s528 = ssub.s32 %s25, 1
        // Predicated region
        $region85: #{tpu_custom_call.1} parent=83 // pred_check
          %p529 = pneg %p140
        $region86: #{tpu_custom_call.1} parent=83 // pred_check_branch
          %531 = sbr.rel (%p529) target = $region88
        $region87: #{tpu_custom_call.1} parent=83 // pred_region
          %532 = dma.done [#allocation3], 128
        $region88: #{tpu_custom_call.1} parent=83 // pred_fallthru
          _
        // Predicated region
        $region89: #{tpu_custom_call.1} parent=83 // pred_check
          %p533 = pneg %p161
        $region90: #{tpu_custom_call.1} parent=83 // pred_check_branch
          %535 = sbr.rel (%p533) target = $region92
        $region91: #{tpu_custom_call.1} parent=83 // pred_region
          %536 = dma.done [#allocation5], 256
        $region92: #{tpu_custom_call.1} parent=83 // pred_fallthru
          _
        // Predicated region
        $region93: #{tpu_custom_call.1} parent=83 // pred_check
          %p537 = pneg %p224
        $region94: #{tpu_custom_call.1} parent=83 // pred_check_branch
          %539 = sbr.rel (%p537) target = $region96
        $region95: #{tpu_custom_call.1} parent=83 // pred_region
          %540 = dma.done [#allocation5], 256
        $region96: #{tpu_custom_call.1} parent=83 // pred_fallthru
          _
        // Predicated region
        $region97: #{tpu_custom_call.1} parent=83 // pred_check
          %p541 = pneg %p308
        $region98: #{tpu_custom_call.1} parent=83 // pred_check_branch
          %543 = sbr.rel (%p541) target = $region100
        $region99: #{tpu_custom_call.1} parent=83 // pred_region
          %544 = dma.done [#allocation8], 512
        $region100: #{tpu_custom_call.1} parent=83 // pred_fallthru
          _
        // Predicated region
        $region101: #{tpu_custom_call.1} parent=83 // pred_check
          %p545 = pneg %p371
        $region102: #{tpu_custom_call.1} parent=83 // pred_check_branch
          %547 = sbr.rel (%p545) target = $region104
        $region103: #{tpu_custom_call.1} parent=83 // pred_region
          %548 = dma.done [#allocation8], 256
        $region104: #{tpu_custom_call.1} parent=83 // pred_fallthru
          _
        %p549 = scmp.lt.s32.totalorder %s30, 2
        %s550 = scalar_select %p549, %s30, 2
        %s551 = smul.addr %s550, 8
        %s552 = scalar_lea.vmem %s0, %s551
        %p553 = pneg %p51
        %p554 = pneg %p48
        %p555 = scmp.lt.s32.totalorder %s30, 2
        %s556 = scalar_select %p555, %s30, 2
        %s557 = smul.addr %s556, 8
        %s558 = scalar_lea.vmem %s1, %s557
        %p559 = pneg %p77
        %p560 = pneg %p74
        %p561 = pneg %p98
        %p562 = pneg %p95
        %p563 = pneg %p119
        %p564 = pneg %p116
        %p565 = pneg %p140
        %p566 = pneg %p137
        %p567 = pneg %p161
        %p568 = pneg %p158
        %p569 = pneg %p182
        %p570 = pneg %p179
        %p571 = pneg %p203
        %p572 = pneg %p200
        %p573 = pneg %p224
        %p574 = pneg %p221
        %p575 = pneg %p245
        %p576 = pneg %p242
        %p577 = pneg %p266
        %p578 = pneg %p263
        %p579 = pneg %p287
        %p580 = pneg %p284
        %p581 = pneg %p308
        %p582 = pneg %p305
        %p583 = pneg %p329
        %p584 = pneg %p326
        %p585 = pneg %p350
        %p586 = pneg %p347
        %p587 = pneg %p371
        %p588 = pneg %p368
        %p589 = pneg %p397
        %p590 = pneg %p394
        %s591 = sand.u32 %s384, 1
        %s592 = sand.u32 %s384, 1
        %s593 = smul.addr %s592, 64
        %s594 = scalar_lea.vmem [#allocation10], %s593
        %p595 = scmp.lt.s32.totalorder %s30, 2
        %s596 = scalar_select %p595, %s30, 2
        %s597 = smul.addr %s596, 8
        %s598 = scalar_lea.vmem %s0, %s597
        %p599 = scmp.lt.s32.totalorder %s30, 2
        %s600 = scalar_select %p599, %s30, 2
        %s601 = smul.addr %s600, 8
        %s602 = scalar_lea.vmem %s1, %s601
        %v603 = vld [vmem:[%s598] sm:$0xff]
        %v604 = vld [vmem:[%s602] sm:$0xff]
        %v605 = vld [vmem:[%s2] sm:$0x1]
        %v606 = vld [vmem:[%s2 + $0x1] sm:$0x1]
        %v607 = vld [vmem:[%s2 + $0x2] sm:$0x1]
        %v608 = vld [vmem:[%s2 + $0x3] sm:$0x1]
        %v609 = vld [vmem:[%s2 + $0x4] sm:$0x1]
        %v610 = vld [vmem:[%s2 + $0x5] sm:$0x1]
        %v611 = vld [vmem:[%s2 + $0x6] sm:$0x1]
        %v612 = vld [vmem:[%s2 + $0x7] sm:$0x1]
        %v613 = vld [vmem:[%s3] sm:$0x1]
        %v614 = vld [vmem:[%s3 + $0x1] sm:$0x1]
        %v615 = vld [vmem:[%s3 + $0x2] sm:$0x1]
        %v616 = vld [vmem:[%s3 + $0x3] sm:$0x1]
        %v617 = vld [vmem:[%s3 + $0x4] sm:$0x1]
        %v618 = vld [vmem:[%s3 + $0x5] sm:$0x1]
        %v619 = vld [vmem:[%s3 + $0x6] sm:$0x1]
        %v620 = vld [vmem:[%s3 + $0x7] sm:$0x1]
        %v621 = vld [vmem:[#allocation2] sm:$0x1]
        %v622 = vld [vmem:[#allocation2 + $0x1] sm:$0x1]
        %v623 = vld [vmem:[#allocation2 + $0x2] sm:$0x1]
        %v624 = vld [vmem:[#allocation2 + $0x3] sm:$0x1]
        %v625 = vld [vmem:[#allocation2 + $0x4] sm:$0x1]
        %v626 = vld [vmem:[#allocation2 + $0x5] sm:$0x1]
        %v627 = vld [vmem:[#allocation2 + $0x6] sm:$0x1]
        %v628 = vld [vmem:[#allocation2 + $0x7] sm:$0x1]
        %v629 = vld [vmem:[#allocation4] sm:$0xff]
        %v630 = vld [vmem:[#allocation4 + $0x8] sm:$0xff]
        %v631 = vld [vmem:[#allocation9] sm:$0x1]
        %v632 = vlaneseq
        %v633 = vshrl.u32 %v632, 7
        %v634 = vsub.s32 0, %v633
        %v635 = vrot.slane %v631, %v634
        %vm636 = vcmask 130048
        %v638 = vsel %vm636, %v603, 0
        %640 = vmatprep.subr.mxu0 0.0
        %641 = vmatpush1.msra.mxu0 %v629
        %642 = vmatprep.subr.mxu0 0.0
        %643 = vmatpush1.msra.mxu0 %v630
        %644 = vmatprep.subr.mxu0 0.0
        %645 = vmatpush1.msra.mxu0 0.0
        %646 = vmatprep.subr.mxu0 0.0
        %647 = vmatpush1.msra.mxu0 0.0
        %648 = vmatprep.subr.mxu0 0.0
        %649 = vmatpush1.msra.mxu0 0.0
        %650 = vmatprep.subr.mxu0 0.0
        %651 = vmatpush1.msra.mxu0 0.0
        %652 = vmatprep.subr.mxu0 0.0
        %653 = vmatpush1.msra.mxu0 0.0
        %654 = vmatprep.subr.mxu0 0.0
        %655 = vmatpush1.msra.mxu0 0.0
        %656 = vmatprep.subr.mxu0 0.0
        %657 = vmatpush1.msra.mxu0 0.0
        %658 = vmatprep.subr.mxu0 0.0
        %659 = vmatpush1.msra.mxu0 0.0
        %660 = vmatprep.subr.mxu0 0.0
        %661 = vmatpush1.msra.mxu0 0.0
        %662 = vmatprep.subr.mxu0 0.0
        %663 = vmatpush1.msra.mxu0 0.0
        %664 = vmatprep.subr.mxu0 0.0
        %665 = vmatpush1.msra.mxu0 0.0
        %666 = vmatprep.subr.mxu0 0.0
        %667 = vmatpush1.msra.mxu0 0.0
        %668 = vmatprep.subr.mxu0 0.0
        %669 = vmatpush1.msra.mxu0 0.0
        %670 = vmatprep.subr.mxu0 0.0
        %671 = vmatpush1.msra.mxu0 0.0
        %672 = vmatprep.subr.mxu0 0.0
        %673 = vmatpush1.msra.mxu0 0.0
        %674 = vmatprep.subr.mxu0 0.0
        %675 = vmatpush1.msra.mxu0 0.0
        %676 = vmatprep.subr.mxu0 0.0
        %677 = vmatpush1.msra.mxu0 0.0
        %678 = vmatprep.subr.mxu0 0.0
        %679 = vmatpush1.msra.mxu0 0.0
        %680 = vmatprep.subr.mxu0 0.0
        %681 = vmatpush1.msra.mxu0 0.0
        %682 = vmatprep.subr.mxu0 0.0
        %683 = vmatpush1.msra.mxu0 0.0
        %684 = vmatprep.subr.mxu0 0.0
        %685 = vmatpush1.msra.mxu0 0.0
        %686 = vmatprep.subr.mxu0 0.0
        %687 = vmatpush1.msra.mxu0 0.0
        %688 = vmatprep.subr.mxu0 0.0
        %689 = vmatpush1.msra.mxu0 0.0
        %690 = vmatprep.subr.mxu0 0.0
        %691 = vmatpush1.msra.mxu0 0.0
        %692 = vmatprep.subr.mxu0 0.0
        %693 = vmatpush1.msra.mxu0 0.0
        %694 = vmatprep.subr.mxu0 0.0
        %695 = vmatpush1.msra.mxu0 0.0
        %696 = vmatprep.subr.mxu0 0.0
        %697 = vmatpush1.msra.mxu0 0.0
        %698 = vmatprep.subr.mxu0 0.0
        %699 = vmatpush1.msra.mxu0 0.0
        %700 = vmatprep.subr.mxu0 0.0
        %701 = vmatpush1.msra.mxu0 0.0
        %702 = vmatprep.subr.mxu0 0.0
        %703 = vmatpush1.msra.mxu0 0.0
        %704 = vmatprep.mubr.f32.mxu0 0.0
        %705 = vmatmul.mubr.f32.gmra.mrb[0].mxu0 %v638
        %v706 = vpop.f32.mrb[0].mxu0
        %v707 = vadd.f32 %v635, %v706
        %v708 = vpop.f32.mrb[0].mxu0
        %709 = vdwg.mxu0
        %v710 = vmax.f32 %v707, 0.0
        %v711 = vld [vmem:[%s6] sm:$0xff]
        %v712 = vld [vmem:[%s6 + $0x8] sm:$0xff]
        %v713 = vld [vmem:[%s6 + $0x10] sm:$0xff]
        %v714 = vld [vmem:[%s6 + $0x18] sm:$0xff]
        %v715 = vld [vmem:[#allocation9 + $0x1] sm:$0x1]
        %v716 = vlaneseq
        %v717 = vshrl.u32 %v716, 7
        %v718 = vsub.s32 0, %v717
        %v719 = vrot.slane %v715, %v718
        %vm720 = vcmask 261120
        %v722 = vsel %vm720, %v710, 0
        %724 = vmatprep.subr.mxu0 0.0
        %725 = vmatpush1.msra.mxu0 %v711
        %726 = vmatprep.subr.mxu0 0.0
        %727 = vmatpush1.msra.mxu0 %v712
        %728 = vmatprep.subr.mxu0 0.0
        %729 = vmatpush1.msra.mxu0 %v713
        %730 = vmatprep.subr.mxu0 0.0
        %731 = vmatpush1.msra.mxu0 %v714
        %732 = vmatprep.subr.mxu0 0.0
        %733 = vmatpush1.msra.mxu0 0.0
        %734 = vmatprep.subr.mxu0 0.0
        %735 = vmatpush1.msra.mxu0 0.0
        %736 = vmatprep.subr.mxu0 0.0
        %737 = vmatpush1.msra.mxu0 0.0
        %738 = vmatprep.subr.mxu0 0.0
        %739 = vmatpush1.msra.mxu0 0.0
        %740 = vmatprep.subr.mxu0 0.0
        %741 = vmatpush1.msra.mxu0 0.0
        %742 = vmatprep.subr.mxu0 0.0
        %743 = vmatpush1.msra.mxu0 0.0
        %744 = vmatprep.subr.mxu0 0.0
        %745 = vmatpush1.msra.mxu0 0.0
        %746 = vmatprep.subr.mxu0 0.0
        %747 = vmatpush1.msra.mxu0 0.0
        %748 = vmatprep.subr.mxu0 0.0
        %749 = vmatpush1.msra.mxu0 0.0
        %750 = vmatprep.subr.mxu0 0.0
        %751 = vmatpush1.msra.mxu0 0.0
        %752 = vmatprep.subr.mxu0 0.0
        %753 = vmatpush1.msra.mxu0 0.0
        %754 = vmatprep.subr.mxu0 0.0
        %755 = vmatpush1.msra.mxu0 0.0
        %756 = vmatprep.subr.mxu0 0.0
        %757 = vmatpush1.msra.mxu0 0.0
        %758 = vmatprep.subr.mxu0 0.0
        %759 = vmatpush1.msra.mxu0 0.0
        %760 = vmatprep.subr.mxu0 0.0
        %761 = vmatpush1.msra.mxu0 0.0
        %762 = vmatprep.subr.mxu0 0.0
        %763 = vmatpush1.msra.mxu0 0.0
        %764 = vmatprep.subr.mxu0 0.0
        %765 = vmatpush1.msra.mxu0 0.0
        %766 = vmatprep.subr.mxu0 0.0
        %767 = vmatpush1.msra.mxu0 0.0
        %768 = vmatprep.subr.mxu0 0.0
        %769 = vmatpush1.msra.mxu0 0.0
        %770 = vmatprep.subr.mxu0 0.0
        %771 = vmatpush1.msra.mxu0 0.0
        %772 = vmatprep.subr.mxu0 0.0
        %773 = vmatpush1.msra.mxu0 0.0
        %774 = vmatprep.subr.mxu0 0.0
        %775 = vmatpush1.msra.mxu0 0.0
        %776 = vmatprep.subr.mxu0 0.0
        %777 = vmatpush1.msra.mxu0 0.0
        %778 = vmatprep.subr.mxu0 0.0
        %779 = vmatpush1.msra.mxu0 0.0
        %780 = vmatprep.subr.mxu0 0.0
        %781 = vmatpush1.msra.mxu0 0.0
        %782 = vmatprep.subr.mxu0 0.0
        %783 = vmatpush1.msra.mxu0 0.0
        %784 = vmatprep.subr.mxu0 0.0
        %785 = vmatpush1.msra.mxu0 0.0
        %786 = vmatprep.subr.mxu0 0.0
        %787 = vmatpush1.msra.mxu0 0.0
        %788 = vmatprep.mubr.f32.mxu0 0.0
        %789 = vmatmul.mubr.f32.gmra.mrb[0].mxu0 %v722
        %v790 = vpop.f32.mrb[0].mxu0
        %v791 = vadd.f32 %v719, %v790
        %v792 = vpop.f32.mrb[0].mxu0
        %793 = vdwg.mxu0
        %v794 = vmax.f32 %v791, 0.0
        %v795 = vld [vmem:[%s7] sm:$0xff]
        %v796 = vld [vmem:[%s7 + $0x8] sm:$0xff]
        %v797 = vld [vmem:[%s7 + $0x10] sm:$0xff]
        %v798 = vld [vmem:[%s7 + $0x18] sm:$0xff]
        %v799 = vld [vmem:[#allocation9 + $0x2] sm:$0x1]
        %v800 = vlaneseq
        %v801 = vshrl.u32 %v800, 7
        %v802 = vsub.s32 0, %v801
        %v803 = vrot.slane %v799, %v802
        %v805 = vsel %vm720, %v794, 0
        %807 = vmatprep.subr.mxu0 0.0
        %808 = vmatpush1.msra.mxu0 %v795
        %809 = vmatprep.subr.mxu0 0.0
        %810 = vmatpush1.msra.mxu0 %v796
        %811 = vmatprep.subr.mxu0 0.0
        %812 = vmatpush1.msra.mxu0 %v797
        %813 = vmatprep.subr.mxu0 0.0
        %814 = vmatpush1.msra.mxu0 %v798
        %815 = vmatprep.subr.mxu0 0.0
        %816 = vmatpush1.msra.mxu0 0.0
        %817 = vmatprep.subr.mxu0 0.0
        %818 = vmatpush1.msra.mxu0 0.0
        %819 = vmatprep.subr.mxu0 0.0
        %820 = vmatpush1.msra.mxu0 0.0
        %821 = vmatprep.subr.mxu0 0.0
        %822 = vmatpush1.msra.mxu0 0.0
        %823 = vmatprep.subr.mxu0 0.0
        %824 = vmatpush1.msra.mxu0 0.0
        %825 = vmatprep.subr.mxu0 0.0
        %826 = vmatpush1.msra.mxu0 0.0
        %827 = vmatprep.subr.mxu0 0.0
        %828 = vmatpush1.msra.mxu0 0.0
        %829 = vmatprep.subr.mxu0 0.0
        %830 = vmatpush1.msra.mxu0 0.0
        %831 = vmatprep.subr.mxu0 0.0
        %832 = vmatpush1.msra.mxu0 0.0
        %833 = vmatprep.subr.mxu0 0.0
        %834 = vmatpush1.msra.mxu0 0.0
        %835 = vmatprep.subr.mxu0 0.0
        %836 = vmatpush1.msra.mxu0 0.0
        %837 = vmatprep.subr.mxu0 0.0
        %838 = vmatpush1.msra.mxu0 0.0
        %839 = vmatprep.subr.mxu0 0.0
        %840 = vmatpush1.msra.mxu0 0.0
        %841 = vmatprep.subr.mxu0 0.0
        %842 = vmatpush1.msra.mxu0 0.0
        %843 = vmatprep.subr.mxu0 0.0
        %844 = vmatpush1.msra.mxu0 0.0
        %845 = vmatprep.subr.mxu0 0.0
        %846 = vmatpush1.msra.mxu0 0.0
        %847 = vmatprep.subr.mxu0 0.0
        %848 = vmatpush1.msra.mxu0 0.0
        %849 = vmatprep.subr.mxu0 0.0
        %850 = vmatpush1.msra.mxu0 0.0
        %851 = vmatprep.subr.mxu0 0.0
        %852 = vmatpush1.msra.mxu0 0.0
        %853 = vmatprep.subr.mxu0 0.0
        %854 = vmatpush1.msra.mxu0 0.0
        %855 = vmatprep.subr.mxu0 0.0
        %856 = vmatpush1.msra.mxu0 0.0
        %857 = vmatprep.subr.mxu0 0.0
        %858 = vmatpush1.msra.mxu0 0.0
        %859 = vmatprep.subr.mxu0 0.0
        %860 = vmatpush1.msra.mxu0 0.0
        %861 = vmatprep.subr.mxu0 0.0
        %862 = vmatpush1.msra.mxu0 0.0
        %863 = vmatprep.subr.mxu0 0.0
        %864 = vmatpush1.msra.mxu0 0.0
        %865 = vmatprep.subr.mxu0 0.0
        %866 = vmatpush1.msra.mxu0 0.0
        %867 = vmatprep.subr.mxu0 0.0
        %868 = vmatpush1.msra.mxu0 0.0
        %869 = vmatprep.subr.mxu0 0.0
        %870 = vmatpush1.msra.mxu0 0.0
        %871 = vmatprep.mubr.f32.mxu0 0.0
        %872 = vmatmul.mubr.f32.gmra.mrb[0].mxu0 %v805
        %v873 = vpop.f32.mrb[0].mxu0
        %v874 = vadd.f32 %v803, %v873
        %v875 = vpop.f32.mrb[0].mxu0
        %876 = vdwg.mxu0
        %v877 = vld [vmem:[#allocation6] sm:$0xff]
        %v878 = vld [vmem:[#allocation6 + $0x8] sm:$0xff]
        %v879 = vld [vmem:[#allocation9 + $0x3] sm:$0x1]
        %v880 = vlaneseq
        %v881 = vshrl.u32 %v880, 7
        %v882 = vsub.s32 0, %v881
        %v883 = vrot.slane %v879, %v882
        %v885 = vsel %vm636, %v604, 0
        %887 = vmatprep.subr.mxu0 0.0
        %888 = vmatpush1.msra.mxu0 %v877
        %889 = vmatprep.subr.mxu0 0.0
        %890 = vmatpush1.msra.mxu0 %v878
        %891 = vmatprep.subr.mxu0 0.0
        %892 = vmatpush1.msra.mxu0 0.0
        %893 = vmatprep.subr.mxu0 0.0
        %894 = vmatpush1.msra.mxu0 0.0
        %895 = vmatprep.subr.mxu0 0.0
        %896 = vmatpush1.msra.mxu0 0.0
        %897 = vmatprep.subr.mxu0 0.0
        %898 = vmatpush1.msra.mxu0 0.0
        %899 = vmatprep.subr.mxu0 0.0
        %900 = vmatpush1.msra.mxu0 0.0
        %901 = vmatprep.subr.mxu0 0.0
        %902 = vmatpush1.msra.mxu0 0.0
        %903 = vmatprep.subr.mxu0 0.0
        %904 = vmatpush1.msra.mxu0 0.0
        %905 = vmatprep.subr.mxu0 0.0
        %906 = vmatpush1.msra.mxu0 0.0
        %907 = vmatprep.subr.mxu0 0.0
        %908 = vmatpush1.msra.mxu0 0.0
        %909 = vmatprep.subr.mxu0 0.0
        %910 = vmatpush1.msra.mxu0 0.0
        %911 = vmatprep.subr.mxu0 0.0
        %912 = vmatpush1.msra.mxu0 0.0
        %913 = vmatprep.subr.mxu0 0.0
        %914 = vmatpush1.msra.mxu0 0.0
        %915 = vmatprep.subr.mxu0 0.0
        %916 = vmatpush1.msra.mxu0 0.0
        %917 = vmatprep.subr.mxu0 0.0
        %918 = vmatpush1.msra.mxu0 0.0
        %919 = vmatprep.subr.mxu0 0.0
        %920 = vmatpush1.msra.mxu0 0.0
        %921 = vmatprep.subr.mxu0 0.0
        %922 = vmatpush1.msra.mxu0 0.0
        %923 = vmatprep.subr.mxu0 0.0
        %924 = vmatpush1.msra.mxu0 0.0
        %925 = vmatprep.subr.mxu0 0.0
        %926 = vmatpush1.msra.mxu0 0.0
        %927 = vmatprep.subr.mxu0 0.0
        %928 = vmatpush1.msra.mxu0 0.0
        %929 = vmatprep.subr.mxu0 0.0
        %930 = vmatpush1.msra.mxu0 0.0
        %931 = vmatprep.subr.mxu0 0.0
        %932 = vmatpush1.msra.mxu0 0.0
        %933 = vmatprep.subr.mxu0 0.0
        %934 = vmatpush1.msra.mxu0 0.0
        %935 = vmatprep.subr.mxu0 0.0
        %936 = vmatpush1.msra.mxu0 0.0
        %937 = vmatprep.subr.mxu0 0.0
        %938 = vmatpush1.msra.mxu0 0.0
        %939 = vmatprep.subr.mxu0 0.0
        %940 = vmatpush1.msra.mxu0 0.0
        %941 = vmatprep.subr.mxu0 0.0
        %942 = vmatpush1.msra.mxu0 0.0
        %943 = vmatprep.subr.mxu0 0.0
        %944 = vmatpush1.msra.mxu0 0.0
        %945 = vmatprep.subr.mxu0 0.0
        %946 = vmatpush1.msra.mxu0 0.0
        %947 = vmatprep.subr.mxu0 0.0
        %948 = vmatpush1.msra.mxu0 0.0
        %949 = vmatprep.subr.mxu0 0.0
        %950 = vmatpush1.msra.mxu0 0.0
        %951 = vmatprep.mubr.f32.mxu0 0.0
        %952 = vmatmul.mubr.f32.gmra.mrb[0].mxu0 %v885
        %v953 = vpop.f32.mrb[0].mxu0
        %v954 = vadd.f32 %v883, %v953
        %v955 = vpop.f32.mrb[0].mxu0
        %956 = vdwg.mxu0
        %v957 = vmax.f32 %v954, 0.0
        %v958 = vld [vmem:[%s9] sm:$0xff]
        %v959 = vld [vmem:[%s9 + $0x8] sm:$0xff]
        %v960 = vld [vmem:[%s9 + $0x10] sm:$0xff]
        %v961 = vld [vmem:[%s9 + $0x18] sm:$0xff]
        %v962 = vld [vmem:[#allocation9 + $0x4] sm:$0x1]
        %v963 = vlaneseq
        %v964 = vshrl.u32 %v963, 7
        %v965 = vsub.s32 0, %v964
        %v966 = vrot.slane %v962, %v965
        %v968 = vsel %vm720, %v957, 0
        %970 = vmatprep.subr.mxu0 0.0
        %971 = vmatpush1.msra.mxu0 %v958
        %972 = vmatprep.subr.mxu0 0.0
        %973 = vmatpush1.msra.mxu0 %v959
        %974 = vmatprep.subr.mxu0 0.0
        %975 = vmatpush1.msra.mxu0 %v960
        %976 = vmatprep.subr.mxu0 0.0
        %977 = vmatpush1.msra.mxu0 %v961
        %978 = vmatprep.subr.mxu0 0.0
        %979 = vmatpush1.msra.mxu0 0.0
        %980 = vmatprep.subr.mxu0 0.0
        %981 = vmatpush1.msra.mxu0 0.0
        %982 = vmatprep.subr.mxu0 0.0
        %983 = vmatpush1.msra.mxu0 0.0
        %984 = vmatprep.subr.mxu0 0.0
        %985 = vmatpush1.msra.mxu0 0.0
        %986 = vmatprep.subr.mxu0 0.0
        %987 = vmatpush1.msra.mxu0 0.0
        %988 = vmatprep.subr.mxu0 0.0
        %989 = vmatpush1.msra.mxu0 0.0
        %990 = vmatprep.subr.mxu0 0.0
        %991 = vmatpush1.msra.mxu0 0.0
        %992 = vmatprep.subr.mxu0 0.0
        %993 = vmatpush1.msra.mxu0 0.0
        %994 = vmatprep.subr.mxu0 0.0
        %995 = vmatpush1.msra.mxu0 0.0
        %996 = vmatprep.subr.mxu0 0.0
        %997 = vmatpush1.msra.mxu0 0.0
        %998 = vmatprep.subr.mxu0 0.0
        %999 = vmatpush1.msra.mxu0 0.0
        %1000 = vmatprep.subr.mxu0 0.0
        %1001 = vmatpush1.msra.mxu0 0.0
        %1002 = vmatprep.subr.mxu0 0.0
        %1003 = vmatpush1.msra.mxu0 0.0
        %1004 = vmatprep.subr.mxu0 0.0
        %1005 = vmatpush1.msra.mxu0 0.0
        %1006 = vmatprep.subr.mxu0 0.0
        %1007 = vmatpush1.msra.mxu0 0.0
        %1008 = vmatprep.subr.mxu0 0.0
        %1009 = vmatpush1.msra.mxu0 0.0
        %1010 = vmatprep.subr.mxu0 0.0
        %1011 = vmatpush1.msra.mxu0 0.0
        %1012 = vmatprep.subr.mxu0 0.0
        %1013 = vmatpush1.msra.mxu0 0.0
        %1014 = vmatprep.subr.mxu0 0.0
        %1015 = vmatpush1.msra.mxu0 0.0
        %1016 = vmatprep.subr.mxu0 0.0
        %1017 = vmatpush1.msra.mxu0 0.0
        %1018 = vmatprep.subr.mxu0 0.0
        %1019 = vmatpush1.msra.mxu0 0.0
        %1020 = vmatprep.subr.mxu0 0.0
        %1021 = vmatpush1.msra.mxu0 0.0
        %1022 = vmatprep.subr.mxu0 0.0
        %1023 = vmatpush1.msra.mxu0 0.0
        %1024 = vmatprep.subr.mxu0 0.0
        %1025 = vmatpush1.msra.mxu0 0.0
        %1026 = vmatprep.subr.mxu0 0.0
        %1027 = vmatpush1.msra.mxu0 0.0
        %1028 = vmatprep.subr.mxu0 0.0
        %1029 = vmatpush1.msra.mxu0 0.0
        %1030 = vmatprep.subr.mxu0 0.0
        %1031 = vmatpush1.msra.mxu0 0.0
        %1032 = vmatprep.subr.mxu0 0.0
        %1033 = vmatpush1.msra.mxu0 0.0
        %1034 = vmatprep.mubr.f32.mxu0 0.0
        %1035 = vmatmul.mubr.f32.gmra.mrb[0].mxu0 %v968
        %v1036 = vpop.f32.mrb[0].mxu0
        %v1037 = vadd.f32 %v966, %v1036
        %v1038 = vpop.f32.mrb[0].mxu0
        %1039 = vdwg.mxu0
        %v1040 = vmax.f32 %v1037, 0.0
        %v1041 = vld [vmem:[%s10] sm:$0xff]
        %v1042 = vld [vmem:[%s10 + $0x8] sm:$0xff]
        %v1043 = vld [vmem:[%s10 + $0x10] sm:$0xff]
        %v1044 = vld [vmem:[%s10 + $0x18] sm:$0xff]
        %v1045 = vld [vmem:[#allocation9 + $0x5] sm:$0x1]
        %v1046 = vlaneseq
        %v1047 = vshrl.u32 %v1046, 7
        %v1048 = vsub.s32 0, %v1047
        %v1049 = vrot.slane %v1045, %v1048
        %v1051 = vsel %vm720, %v1040, 0
        %1053 = vmatprep.subr.mxu0 0.0
        %1054 = vmatpush1.msra.mxu0 %v1041
        %1055 = vmatprep.subr.mxu0 0.0
        %1056 = vmatpush1.msra.mxu0 %v1042
        %1057 = vmatprep.subr.mxu0 0.0
        %1058 = vmatpush1.msra.mxu0 %v1043
        %1059 = vmatprep.subr.mxu0 0.0
        %1060 = vmatpush1.msra.mxu0 %v1044
        %1061 = vmatprep.subr.mxu0 0.0
        %1062 = vmatpush1.msra.mxu0 0.0
        %1063 = vmatprep.subr.mxu0 0.0
        %1064 = vmatpush1.msra.mxu0 0.0
        %1065 = vmatprep.subr.mxu0 0.0
        %1066 = vmatpush1.msra.mxu0 0.0
        %1067 = vmatprep.subr.mxu0 0.0
        %1068 = vmatpush1.msra.mxu0 0.0
        %1069 = vmatprep.subr.mxu0 0.0
        %1070 = vmatpush1.msra.mxu0 0.0
        %1071 = vmatprep.subr.mxu0 0.0
        %1072 = vmatpush1.msra.mxu0 0.0
        %1073 = vmatprep.subr.mxu0 0.0
        %1074 = vmatpush1.msra.mxu0 0.0
        %1075 = vmatprep.subr.mxu0 0.0
        %1076 = vmatpush1.msra.mxu0 0.0
        %1077 = vmatprep.subr.mxu0 0.0
        %1078 = vmatpush1.msra.mxu0 0.0
        %1079 = vmatprep.subr.mxu0 0.0
        %1080 = vmatpush1.msra.mxu0 0.0
        %1081 = vmatprep.subr.mxu0 0.0
        %1082 = vmatpush1.msra.mxu0 0.0
        %1083 = vmatprep.subr.mxu0 0.0
        %1084 = vmatpush1.msra.mxu0 0.0
        %1085 = vmatprep.subr.mxu0 0.0
        %1086 = vmatpush1.msra.mxu0 0.0
        %1087 = vmatprep.subr.mxu0 0.0
        %1088 = vmatpush1.msra.mxu0 0.0
        %1089 = vmatprep.subr.mxu0 0.0
        %1090 = vmatpush1.msra.mxu0 0.0
        %1091 = vmatprep.subr.mxu0 0.0
        %1092 = vmatpush1.msra.mxu0 0.0
        %1093 = vmatprep.subr.mxu0 0.0
        %1094 = vmatpush1.msra.mxu0 0.0
        %1095 = vmatprep.subr.mxu0 0.0
        %1096 = vmatpush1.msra.mxu0 0.0
        %1097 = vmatprep.subr.mxu0 0.0
        %1098 = vmatpush1.msra.mxu0 0.0
        %1099 = vmatprep.subr.mxu0 0.0
        %1100 = vmatpush1.msra.mxu0 0.0
        %1101 = vmatprep.subr.mxu0 0.0
        %1102 = vmatpush1.msra.mxu0 0.0
        %1103 = vmatprep.subr.mxu0 0.0
        %1104 = vmatpush1.msra.mxu0 0.0
        %1105 = vmatprep.subr.mxu0 0.0
        %1106 = vmatpush1.msra.mxu0 0.0
        %1107 = vmatprep.subr.mxu0 0.0
        %1108 = vmatpush1.msra.mxu0 0.0
        %1109 = vmatprep.subr.mxu0 0.0
        %1110 = vmatpush1.msra.mxu0 0.0
        %1111 = vmatprep.subr.mxu0 0.0
        %1112 = vmatpush1.msra.mxu0 0.0
        %1113 = vmatprep.subr.mxu0 0.0
        %1114 = vmatpush1.msra.mxu0 0.0
        %1115 = vmatprep.subr.mxu0 0.0
        %1116 = vmatpush1.msra.mxu0 0.0
        %1117 = vmatprep.mubr.f32.mxu0 0.0
        %1118 = vmatmul.mubr.f32.gmra.mrb[0].mxu0 %v1051
        %v1119 = vpop.f32.mrb[0].mxu0
        %v1120 = vadd.f32 %v1049, %v1119
        %v1121 = vpop.f32.mrb[0].mxu0
        %1122 = vdwg.mxu0
        %v1123 = vld [vmem:[%s11] sm:$0xff]
        %v1124 = vld [vmem:[%s11 + $0x8] sm:$0xff]
        %v1125 = vld [vmem:[%s11 + $0x10] sm:$0xff]
        %v1126 = vld [vmem:[%s11 + $0x18] sm:$0xff]
        %v1127 = vld [vmem:[#allocation7] sm:$0xff]
        %v1128 = vld [vmem:[#allocation7 + $0x8] sm:$0xff]
        %v1129 = vld [vmem:[#allocation7 + $0x10] sm:$0xff]
        %v1130 = vld [vmem:[#allocation7 + $0x18] sm:$0xff]
        %v1132 = vsel %vm720, %v1120, 0
        %1134 = vmatprep.subr.mxu0 0.0
        %1135 = vmatpush1.msra.mxu0 %v1127
        %1136 = vmatprep.subr.mxu0 0.0
        %1137 = vmatpush1.msra.mxu0 %v1128
        %1138 = vmatprep.subr.mxu0 0.0
        %1139 = vmatpush1.msra.mxu0 %v1129
        %1140 = vmatprep.subr.mxu0 0.0
        %1141 = vmatpush1.msra.mxu0 %v1130
        %1142 = vmatprep.subr.mxu0 0.0
        %1143 = vmatpush1.msra.mxu0 0.0
        %1144 = vmatprep.subr.mxu0 0.0
        %1145 = vmatpush1.msra.mxu0 0.0
        %1146 = vmatprep.subr.mxu0 0.0
        %1147 = vmatpush1.msra.mxu0 0.0
        %1148 = vmatprep.subr.mxu0 0.0
        %1149 = vmatpush1.msra.mxu0 0.0
        %1150 = vmatprep.subr.mxu0 0.0
        %1151 = vmatpush1.msra.mxu0 0.0
        %1152 = vmatprep.subr.mxu0 0.0
        %1153 = vmatpush1.msra.mxu0 0.0
        %1154 = vmatprep.subr.mxu0 0.0
        %1155 = vmatpush1.msra.mxu0 0.0
        %1156 = vmatprep.subr.mxu0 0.0
        %1157 = vmatpush1.msra.mxu0 0.0
        %1158 = vmatprep.subr.mxu0 0.0
        %1159 = vmatpush1.msra.mxu0 0.0
        %1160 = vmatprep.subr.mxu0 0.0
        %1161 = vmatpush1.msra.mxu0 0.0
        %1162 = vmatprep.subr.mxu0 0.0
        %1163 = vmatpush1.msra.mxu0 0.0
        %1164 = vmatprep.subr.mxu0 0.0
        %1165 = vmatpush1.msra.mxu0 0.0
        %1166 = vmatprep.subr.mxu0 0.0
        %1167 = vmatpush1.msra.mxu0 0.0
        %1168 = vmatprep.subr.mxu0 0.0
        %1169 = vmatpush1.msra.mxu0 0.0
        %1170 = vmatprep.subr.mxu0 0.0
        %1171 = vmatpush1.msra.mxu0 0.0
        %1172 = vmatprep.subr.mxu0 0.0
        %1173 = vmatpush1.msra.mxu0 0.0
        %1174 = vmatprep.subr.mxu0 0.0
        %1175 = vmatpush1.msra.mxu0 0.0
        %1176 = vmatprep.subr.mxu0 0.0
        %1177 = vmatpush1.msra.mxu0 0.0
        %1178 = vmatprep.subr.mxu0 0.0
        %1179 = vmatpush1.msra.mxu0 0.0
        %1180 = vmatprep.subr.mxu0 0.0
        %1181 = vmatpush1.msra.mxu0 0.0
        %1182 = vmatprep.subr.mxu0 0.0
        %1183 = vmatpush1.msra.mxu0 0.0
        %1184 = vmatprep.subr.mxu0 0.0
        %1185 = vmatpush1.msra.mxu0 0.0
        %1186 = vmatprep.subr.mxu0 0.0
        %1187 = vmatpush1.msra.mxu0 0.0
        %1188 = vmatprep.subr.mxu0 0.0
        %1189 = vmatpush1.msra.mxu0 0.0
        %1190 = vmatprep.subr.mxu0 0.0
        %1191 = vmatpush1.msra.mxu0 0.0
        %1192 = vmatprep.subr.mxu0 0.0
        %1193 = vmatpush1.msra.mxu0 0.0
        %1194 = vmatprep.subr.mxu0 0.0
        %1195 = vmatpush1.msra.mxu0 0.0
        %1196 = vmatprep.subr.mxu0 0.0
        %1197 = vmatpush1.msra.mxu0 0.0
        %1198 = vmatprep.mubr.f32.mxu0 0.0
        %1199 = vmatmul.mubr.f32.gmra.mrb[0].mxu0 %v1132
        %v1200 = vpop.f32.mrb[0].mxu0
        %v1201 = vadd.f32 0.0, %v1200
        %v1202 = vpop.f32.mrb[0].mxu0
        %1203 = vdwg.mxu0
        %v1205 = vsel %vm720, %v874, 0
        %1207 = vmatprep.subr.mxu0 0.0
        %1208 = vmatpush1.msra.mxu0 %v1123
        %1209 = vmatprep.subr.mxu0 0.0
        %1210 = vmatpush1.msra.mxu0 %v1124
        %1211 = vmatprep.subr.mxu0 0.0
        %1212 = vmatpush1.msra.mxu0 %v1125
        %1213 = vmatprep.subr.mxu0 0.0
        %1214 = vmatpush1.msra.mxu0 %v1126
        %1215 = vmatprep.subr.mxu0 0.0
        %1216 = vmatpush1.msra.mxu0 0.0
        %1217 = vmatprep.subr.mxu0 0.0
        %1218 = vmatpush1.msra.mxu0 0.0
        %1219 = vmatprep.subr.mxu0 0.0
        %1220 = vmatpush1.msra.mxu0 0.0
        %1221 = vmatprep.subr.mxu0 0.0
        %1222 = vmatpush1.msra.mxu0 0.0
        %1223 = vmatprep.subr.mxu0 0.0
        %1224 = vmatpush1.msra.mxu0 0.0
        %1225 = vmatprep.subr.mxu0 0.0
        %1226 = vmatpush1.msra.mxu0 0.0
        %1227 = vmatprep.subr.mxu0 0.0
        %1228 = vmatpush1.msra.mxu0 0.0
        %1229 = vmatprep.subr.mxu0 0.0
        %1230 = vmatpush1.msra.mxu0 0.0
        %1231 = vmatprep.subr.mxu0 0.0
        %1232 = vmatpush1.msra.mxu0 0.0
        %1233 = vmatprep.subr.mxu0 0.0
        %1234 = vmatpush1.msra.mxu0 0.0
        %1235 = vmatprep.subr.mxu0 0.0
        %1236 = vmatpush1.msra.mxu0 0.0
        %1237 = vmatprep.subr.mxu0 0.0
        %1238 = vmatpush1.msra.mxu0 0.0
        %1239 = vmatprep.subr.mxu0 0.0
        %1240 = vmatpush1.msra.mxu0 0.0
        %1241 = vmatprep.subr.mxu0 0.0
        %1242 = vmatpush1.msra.mxu0 0.0
        %1243 = vmatprep.subr.mxu0 0.0
        %1244 = vmatpush1.msra.mxu0 0.0
        %1245 = vmatprep.subr.mxu0 0.0
        %1246 = vmatpush1.msra.mxu0 0.0
        %1247 = vmatprep.subr.mxu0 0.0
        %1248 = vmatpush1.msra.mxu0 0.0
        %1249 = vmatprep.subr.mxu0 0.0
        %1250 = vmatpush1.msra.mxu0 0.0
        %1251 = vmatprep.subr.mxu0 0.0
        %1252 = vmatpush1.msra.mxu0 0.0
        %1253 = vmatprep.subr.mxu0 0.0
        %1254 = vmatpush1.msra.mxu0 0.0
        %1255 = vmatprep.subr.mxu0 0.0
        %1256 = vmatpush1.msra.mxu0 0.0
        %1257 = vmatprep.subr.mxu0 0.0
        %1258 = vmatpush1.msra.mxu0 0.0
        %1259 = vmatprep.subr.mxu0 0.0
        %1260 = vmatpush1.msra.mxu0 0.0
        %1261 = vmatprep.subr.mxu0 0.0
        %1262 = vmatpush1.msra.mxu0 0.0
        %1263 = vmatprep.subr.mxu0 0.0
        %1264 = vmatpush1.msra.mxu0 0.0
        %1265 = vmatprep.subr.mxu0 0.0
        %1266 = vmatpush1.msra.mxu0 0.0
        %1267 = vmatprep.subr.mxu0 0.0
        %1268 = vmatpush1.msra.mxu0 0.0
        %1269 = vmatprep.subr.mxu0 0.0
        %1270 = vmatpush1.msra.mxu0 0.0
        %1271 = vmatprep.mubr.f32.mxu0 0.0
        %1272 = vmatmul.mubr.f32.gmra.mrb[0].mxu0 %v1205
        %v1273 = vpop.f32.mrb[0].mxu0
        %v1274 = vadd.f32 %v1201, %v1273
        %v1275 = vpop.f32.mrb[0].mxu0
        %1276 = vdwg.mxu0
        %v1277 = vld [vmem:[#allocation9 + $0x6] sm:$0x1]
        %v1278 = vlaneseq
        %v1279 = vshrl.u32 %v1278, 7
        %v1280 = vsub.s32 0, %v1279
        %v1281 = vrot.slane %v1277, %v1280
        %v1282 = vadd.f32 %v1274, %v1281
        %v1291 = vlaneseq
        %v1292 = vshrl.u32 %v1291, 7
        %v1293 = vsub.s32 0, %v1292
        %v1294 = vrot.slane %v621, %v1293
        %v1295 = vlaneseq
        %v1296 = vshrl.u32 %v1295, 7
        %v1297 = vsub.s32 0, %v1296
        %v1298 = vrot.slane %v622, %v1297
        %v1299 = vlaneseq
        %v1300 = vshrl.u32 %v1299, 7
        %v1301 = vsub.s32 0, %v1300
        %v1302 = vrot.slane %v623, %v1301
        %v1303 = vlaneseq
        %v1304 = vshrl.u32 %v1303, 7
        %v1305 = vsub.s32 0, %v1304
        %v1306 = vrot.slane %v624, %v1305
        %v1307 = vlaneseq
        %v1308 = vshrl.u32 %v1307, 7
        %v1309 = vsub.s32 0, %v1308
        %v1310 = vrot.slane %v625, %v1309
        %v1311 = vlaneseq
        %v1312 = vshrl.u32 %v1311, 7
        %v1313 = vsub.s32 0, %v1312
        %v1314 = vrot.slane %v626, %v1313
        %v1315 = vlaneseq
        %v1316 = vshrl.u32 %v1315, 7
        %v1317 = vsub.s32 0, %v1316
        %v1318 = vrot.slane %v627, %v1317
        %v1319 = vlaneseq
        %v1320 = vshrl.u32 %v1319, 7
        %v1321 = vsub.s32 0, %v1320
        %v1322 = vrot.slane %v628, %v1321
        %v1331 = vadd.f32 %v1294, %v1282
        %v1332 = vadd.f32 %v1298, %v1282
        %v1333 = vadd.f32 %v1302, %v1282
        %v1334 = vadd.f32 %v1306, %v1282
        %v1335 = vadd.f32 %v1310, %v1282
        %v1336 = vadd.f32 %v1314, %v1282
        %v1337 = vadd.f32 %v1318, %v1282
        %v1338 = vadd.f32 %v1322, %v1282
        %v1339 = vmax.f32 %v1331, 0.0
        %v1340 = vmax.f32 %v1332, 0.0
        %v1341 = vmax.f32 %v1333, 0.0
        %v1342 = vmax.f32 %v1334, 0.0
        %v1343 = vmax.f32 %v1335, 0.0
        %v1344 = vmax.f32 %v1336, 0.0
        %v1345 = vmax.f32 %v1337, 0.0
        %v1346 = vmax.f32 %v1338, 0.0
        %v1347 = vld [vmem:[%s13] sm:$0xff]
        %v1348 = vld [vmem:[%s13 + $0x8] sm:$0xff]
        %v1349 = vld [vmem:[%s13 + $0x10] sm:$0xff]
        %v1350 = vld [vmem:[%s13 + $0x18] sm:$0xff]
        %v1351 = vld [vmem:[#allocation9 + $0x7] sm:$0x1]
        %v1352 = vlaneseq
        %v1353 = vshrl.u32 %v1352, 7
        %v1354 = vsub.s32 0, %v1353
        %v1355 = vrot.slane %v1351, %v1354
        %v1357 = vsel %vm720, %v1339, 0
        %v1360 = vsel %vm720, %v1340, 0
        %v1363 = vsel %vm720, %v1341, 0
        %v1366 = vsel %vm720, %v1342, 0
        %v1369 = vsel %vm720, %v1343, 0
        %v1372 = vsel %vm720, %v1344, 0
        %v1375 = vsel %vm720, %v1345, 0
        %v1378 = vsel %vm720, %v1346, 0
        %1380 = vmatprep.subr.mxu0 0.0
        %1381 = vmatpush1.msra.mxu0 %v1347
        %1382 = vmatprep.subr.mxu0 0.0
        %1383 = vmatpush1.msra.mxu0 %v1348
        %1384 = vmatprep.subr.mxu0 0.0
        %1385 = vmatpush1.msra.mxu0 %v1349
        %1386 = vmatprep.subr.mxu0 0.0
        %1387 = vmatpush1.msra.mxu0 %v1350
        %1388 = vmatprep.subr.mxu0 0.0
        %1389 = vmatpush1.msra.mxu0 0.0
        %1390 = vmatprep.subr.mxu0 0.0
        %1391 = vmatpush1.msra.mxu0 0.0
        %1392 = vmatprep.subr.mxu0 0.0
        %1393 = vmatpush1.msra.mxu0 0.0
        %1394 = vmatprep.subr.mxu0 0.0
        %1395 = vmatpush1.msra.mxu0 0.0
        %1396 = vmatprep.subr.mxu0 0.0
        %1397 = vmatpush1.msra.mxu0 0.0
        %1398 = vmatprep.subr.mxu0 0.0
        %1399 = vmatpush1.msra.mxu0 0.0
        %1400 = vmatprep.subr.mxu0 0.0
        %1401 = vmatpush1.msra.mxu0 0.0
        %1402 = vmatprep.subr.mxu0 0.0
        %1403 = vmatpush1.msra.mxu0 0.0
        %1404 = vmatprep.subr.mxu0 0.0
        %1405 = vmatpush1.msra.mxu0 0.0
        %1406 = vmatprep.subr.mxu0 0.0
        %1407 = vmatpush1.msra.mxu0 0.0
        %1408 = vmatprep.subr.mxu0 0.0
        %1409 = vmatpush1.msra.mxu0 0.0
        %1410 = vmatprep.subr.mxu0 0.0
        %1411 = vmatpush1.msra.mxu0 0.0
        %1412 = vmatprep.subr.mxu0 0.0
        %1413 = vmatpush1.msra.mxu0 0.0
        %1414 = vmatprep.subr.mxu0 0.0
        %1415 = vmatpush1.msra.mxu0 0.0
        %1416 = vmatprep.subr.mxu0 0.0
        %1417 = vmatpush1.msra.mxu0 0.0
        %1418 = vmatprep.subr.mxu0 0.0
        %1419 = vmatpush1.msra.mxu0 0.0
        %1420 = vmatprep.subr.mxu0 0.0
        %1421 = vmatpush1.msra.mxu0 0.0
        %1422 = vmatprep.subr.mxu0 0.0
        %1423 = vmatpush1.msra.mxu0 0.0
        %1424 = vmatprep.subr.mxu0 0.0
        %1425 = vmatpush1.msra.mxu0 0.0
        %1426 = vmatprep.subr.mxu0 0.0
        %1427 = vmatpush1.msra.mxu0 0.0
        %1428 = vmatprep.subr.mxu0 0.0
        %1429 = vmatpush1.msra.mxu0 0.0
        %1430 = vmatprep.subr.mxu0 0.0
        %1431 = vmatpush1.msra.mxu0 0.0
        %1432 = vmatprep.subr.mxu0 0.0
        %1433 = vmatpush1.msra.mxu0 0.0
        %1434 = vmatprep.subr.mxu0 0.0
        %1435 = vmatpush1.msra.mxu0 0.0
        %1436 = vmatprep.subr.mxu0 0.0
        %1437 = vmatpush1.msra.mxu0 0.0
        %1438 = vmatprep.subr.mxu0 0.0
        %1439 = vmatpush1.msra.mxu0 0.0
        %1440 = vmatprep.subr.mxu0 0.0
        %1441 = vmatpush1.msra.mxu0 0.0
        %1442 = vmatprep.subr.mxu0 0.0
        %1443 = vmatpush1.msra.mxu0 0.0
        %1444 = vmatprep.mubr.f32.mxu0 0.0
        %1445 = vmatmul.mubr.f32.gmra.mrb[0].mxu0 %v1357
        %v1446 = vpop.f32.mrb[0].mxu0
        %v1447 = vadd.f32 %v1355, %v1446
        %v1448 = vpop.f32.mrb[0].mxu0
        %1449 = vmatprep.mubr.f32.mxu0 0.0
        %1450 = vmatmul.mubr.f32.gmra.mrb[0].mxu0 %v1360
        %v1451 = vpop.f32.mrb[0].mxu0
        %v1452 = vadd.f32 %v1355, %v1451
        %v1453 = vpop.f32.mrb[0].mxu0
        %1454 = vmatprep.mubr.f32.mxu0 0.0
        %1455 = vmatmul.mubr.f32.gmra.mrb[0].mxu0 %v1363
        %v1456 = vpop.f32.mrb[0].mxu0
        %v1457 = vadd.f32 %v1355, %v1456
        %v1458 = vpop.f32.mrb[0].mxu0
        %1459 = vmatprep.mubr.f32.mxu0 0.0
        %1460 = vmatmul.mubr.f32.gmra.mrb[0].mxu0 %v1366
        %v1461 = vpop.f32.mrb[0].mxu0
        %v1462 = vadd.f32 %v1355, %v1461
        %v1463 = vpop.f32.mrb[0].mxu0
        %1464 = vmatprep.mubr.f32.mxu0 0.0
        %1465 = vmatmul.mubr.f32.gmra.mrb[0].mxu0 %v1369
        %v1466 = vpop.f32.mrb[0].mxu0
        %v1467 = vadd.f32 %v1355, %v1466
        %v1468 = vpop.f32.mrb[0].mxu0
        %1469 = vmatprep.mubr.f32.mxu0 0.0
        %1470 = vmatmul.mubr.f32.gmra.mrb[0].mxu0 %v1372
        %v1471 = vpop.f32.mrb[0].mxu0
        %v1472 = vadd.f32 %v1355, %v1471
        %v1473 = vpop.f32.mrb[0].mxu0
        %1474 = vmatprep.mubr.f32.mxu0 0.0
        %1475 = vmatmul.mubr.f32.gmra.mrb[0].mxu0 %v1375
        %v1476 = vpop.f32.mrb[0].mxu0
        %v1477 = vadd.f32 %v1355, %v1476
        %v1478 = vpop.f32.mrb[0].mxu0
        %1479 = vmatprep.mubr.f32.mxu0 0.0
        %1480 = vmatmul.mubr.f32.gmra.mrb[0].mxu0 %v1378
        %v1481 = vpop.f32.mrb[0].mxu0
        %v1482 = vadd.f32 %v1355, %v1481
        %v1483 = vpop.f32.mrb[0].mxu0
        %1484 = vdwg.mxu0
        %v1485 = vmax.f32 %v1447, 0.0
        %v1486 = vmax.f32 %v1452, 0.0
        %v1487 = vmax.f32 %v1457, 0.0
        %v1488 = vmax.f32 %v1462, 0.0
        %v1489 = vmax.f32 %v1467, 0.0
        %v1490 = vmax.f32 %v1472, 0.0
        %v1491 = vmax.f32 %v1477, 0.0
        %v1492 = vmax.f32 %v1482, 0.0
        %v1493 = vld [vmem:[%s14] sm:$0xff]
        %v1494 = vld [vmem:[%s14 + $0x8] sm:$0xff]
        %v1495 = vld [vmem:[%s14 + $0x10] sm:$0xff]
        %v1496 = vld [vmem:[%s14 + $0x18] sm:$0xff]
        %v1497 = vld [vmem:[#allocation9 + $0x8] sm:$0x1]
        %v1498 = vlaneseq
        %v1499 = vshrl.u32 %v1498, 7
        %v1500 = vsub.s32 0, %v1499
        %v1501 = vrot.slane %v1497, %v1500
        %v1503 = vsel %vm720, %v1485, 0
        %v1506 = vsel %vm720, %v1486, 0
        %v1509 = vsel %vm720, %v1487, 0
        %v1512 = vsel %vm720, %v1488, 0
        %v1515 = vsel %vm720, %v1489, 0
        %v1518 = vsel %vm720, %v1490, 0
        %v1521 = vsel %vm720, %v1491, 0
        %v1524 = vsel %vm720, %v1492, 0
        %1526 = vmatprep.subr.mxu0 0.0
        %1527 = vmatpush1.msra.mxu0 %v1493
        %1528 = vmatprep.subr.mxu0 0.0
        %1529 = vmatpush1.msra.mxu0 %v1494
        %1530 = vmatprep.subr.mxu0 0.0
        %1531 = vmatpush1.msra.mxu0 %v1495
        %1532 = vmatprep.subr.mxu0 0.0
        %1533 = vmatpush1.msra.mxu0 %v1496
        %1534 = vmatprep.subr.mxu0 0.0
        %1535 = vmatpush1.msra.mxu0 0.0
        %1536 = vmatprep.subr.mxu0 0.0
        %1537 = vmatpush1.msra.mxu0 0.0
        %1538 = vmatprep.subr.mxu0 0.0
        %1539 = vmatpush1.msra.mxu0 0.0
        %1540 = vmatprep.subr.mxu0 0.0
        %1541 = vmatpush1.msra.mxu0 0.0
        %1542 = vmatprep.subr.mxu0 0.0
        %1543 = vmatpush1.msra.mxu0 0.0
        %1544 = vmatprep.subr.mxu0 0.0
        %1545 = vmatpush1.msra.mxu0 0.0
        %1546 = vmatprep.subr.mxu0 0.0
        %1547 = vmatpush1.msra.mxu0 0.0
        %1548 = vmatprep.subr.mxu0 0.0
        %1549 = vmatpush1.msra.mxu0 0.0
        %1550 = vmatprep.subr.mxu0 0.0
        %1551 = vmatpush1.msra.mxu0 0.0
        %1552 = vmatprep.subr.mxu0 0.0
        %1553 = vmatpush1.msra.mxu0 0.0
        %1554 = vmatprep.subr.mxu0 0.0
        %1555 = vmatpush1.msra.mxu0 0.0
        %1556 = vmatprep.subr.mxu0 0.0
        %1557 = vmatpush1.msra.mxu0 0.0
        %1558 = vmatprep.subr.mxu0 0.0
        %1559 = vmatpush1.msra.mxu0 0.0
        %1560 = vmatprep.subr.mxu0 0.0
        %1561 = vmatpush1.msra.mxu0 0.0
        %1562 = vmatprep.subr.mxu0 0.0
        %1563 = vmatpush1.msra.mxu0 0.0
        %1564 = vmatprep.subr.mxu0 0.0
        %1565 = vmatpush1.msra.mxu0 0.0
        %1566 = vmatprep.subr.mxu0 0.0
        %1567 = vmatpush1.msra.mxu0 0.0
        %1568 = vmatprep.subr.mxu0 0.0
        %1569 = vmatpush1.msra.mxu0 0.0
        %1570 = vmatprep.subr.mxu0 0.0
        %1571 = vmatpush1.msra.mxu0 0.0
        %1572 = vmatprep.subr.mxu0 0.0
        %1573 = vmatpush1.msra.mxu0 0.0
        %1574 = vmatprep.subr.mxu0 0.0
        %1575 = vmatpush1.msra.mxu0 0.0
        %1576 = vmatprep.subr.mxu0 0.0
        %1577 = vmatpush1.msra.mxu0 0.0
        %1578 = vmatprep.subr.mxu0 0.0
        %1579 = vmatpush1.msra.mxu0 0.0
        %1580 = vmatprep.subr.mxu0 0.0
        %1581 = vmatpush1.msra.mxu0 0.0
        %1582 = vmatprep.subr.mxu0 0.0
        %1583 = vmatpush1.msra.mxu0 0.0
        %1584 = vmatprep.subr.mxu0 0.0
        %1585 = vmatpush1.msra.mxu0 0.0
        %1586 = vmatprep.subr.mxu0 0.0
        %1587 = vmatpush1.msra.mxu0 0.0
        %1588 = vmatprep.subr.mxu0 0.0
        %1589 = vmatpush1.msra.mxu0 0.0
        %1590 = vmatprep.mubr.f32.mxu0 0.0
        %1591 = vmatmul.mubr.f32.gmra.mrb[0].mxu0 %v1503
        %v1592 = vpop.f32.mrb[0].mxu0
        %v1593 = vadd.f32 %v1501, %v1592
        %v1594 = vpop.f32.mrb[0].mxu0
        %1595 = vmatprep.mubr.f32.mxu0 0.0
        %1596 = vmatmul.mubr.f32.gmra.mrb[0].mxu0 %v1506
        %v1597 = vpop.f32.mrb[0].mxu0
        %v1598 = vadd.f32 %v1501, %v1597
        %v1599 = vpop.f32.mrb[0].mxu0
        %1600 = vmatprep.mubr.f32.mxu0 0.0
        %1601 = vmatmul.mubr.f32.gmra.mrb[0].mxu0 %v1509
        %v1602 = vpop.f32.mrb[0].mxu0
        %v1603 = vadd.f32 %v1501, %v1602
        %v1604 = vpop.f32.mrb[0].mxu0
        %1605 = vmatprep.mubr.f32.mxu0 0.0
        %1606 = vmatmul.mubr.f32.gmra.mrb[0].mxu0 %v1512
        %v1607 = vpop.f32.mrb[0].mxu0
        %v1608 = vadd.f32 %v1501, %v1607
        %v1609 = vpop.f32.mrb[0].mxu0
        %1610 = vmatprep.mubr.f32.mxu0 0.0
        %1611 = vmatmul.mubr.f32.gmra.mrb[0].mxu0 %v1515
        %v1612 = vpop.f32.mrb[0].mxu0
        %v1613 = vadd.f32 %v1501, %v1612
        %v1614 = vpop.f32.mrb[0].mxu0
        %1615 = vmatprep.mubr.f32.mxu0 0.0
        %1616 = vmatmul.mubr.f32.gmra.mrb[0].mxu0 %v1518
        %v1617 = vpop.f32.mrb[0].mxu0
        %v1618 = vadd.f32 %v1501, %v1617
        %v1619 = vpop.f32.mrb[0].mxu0
        %1620 = vmatprep.mubr.f32.mxu0 0.0
        %1621 = vmatmul.mubr.f32.gmra.mrb[0].mxu0 %v1521
        %v1622 = vpop.f32.mrb[0].mxu0
        %v1623 = vadd.f32 %v1501, %v1622
        %v1624 = vpop.f32.mrb[0].mxu0
        %1625 = vmatprep.mubr.f32.mxu0 0.0
        %1626 = vmatmul.mubr.f32.gmra.mrb[0].mxu0 %v1524
        %v1627 = vpop.f32.mrb[0].mxu0
        %v1628 = vadd.f32 %v1501, %v1627
        %v1629 = vpop.f32.mrb[0].mxu0
        %1630 = vdwg.mxu0
        %v1631 = vsub.f32 1.0, %v605
        %v1632 = vsub.f32 1.0, %v606
        %v1633 = vsub.f32 1.0, %v607
        %v1634 = vsub.f32 1.0, %v608
        %v1635 = vsub.f32 1.0, %v609
        %v1636 = vsub.f32 1.0, %v610
        %v1637 = vsub.f32 1.0, %v611
        %v1638 = vsub.f32 1.0, %v612
        %v1647 = vlaneseq
        %v1648 = vshrl.u32 %v1647, 7
        %v1649 = vsub.s32 0, %v1648
        %v1650 = vrot.slane %v1631, %v1649
        %v1651 = vlaneseq
        %v1652 = vshrl.u32 %v1651, 7
        %v1653 = vsub.s32 0, %v1652
        %v1654 = vrot.slane %v1632, %v1653
        %v1655 = vlaneseq
        %v1656 = vshrl.u32 %v1655, 7
        %v1657 = vsub.s32 0, %v1656
        %v1658 = vrot.slane %v1633, %v1657
        %v1659 = vlaneseq
        %v1660 = vshrl.u32 %v1659, 7
        %v1661 = vsub.s32 0, %v1660
        %v1662 = vrot.slane %v1634, %v1661
        %v1663 = vlaneseq
        %v1664 = vshrl.u32 %v1663, 7
        %v1665 = vsub.s32 0, %v1664
        %v1666 = vrot.slane %v1635, %v1665
        %v1667 = vlaneseq
        %v1668 = vshrl.u32 %v1667, 7
        %v1669 = vsub.s32 0, %v1668
        %v1670 = vrot.slane %v1636, %v1669
        %v1671 = vlaneseq
        %v1672 = vshrl.u32 %v1671, 7
        %v1673 = vsub.s32 0, %v1672
        %v1674 = vrot.slane %v1637, %v1673
        %v1675 = vlaneseq
        %v1676 = vshrl.u32 %v1675, 7
        %v1677 = vsub.s32 0, %v1676
        %v1678 = vrot.slane %v1638, %v1677
        %1679 = vset.pattern.permute.xlu0 0
        %1680 = vperm.xlu0 %1679, %v1650
        %v1681 = vpop.permute.xlu0 %1680
        %1683 = vset.pattern.permute.xlu0 0
        %1684 = vperm.xlu0 %1683, %v1654
        %v1685 = vpop.permute.xlu0 %1684
        %1687 = vset.pattern.permute.xlu0 0
        %1688 = vperm.xlu0 %1687, %v1658
        %v1689 = vpop.permute.xlu0 %1688
        %1691 = vset.pattern.permute.xlu0 0
        %1692 = vperm.xlu0 %1691, %v1662
        %v1693 = vpop.permute.xlu0 %1692
        %1695 = vset.pattern.permute.xlu0 0
        %1696 = vperm.xlu0 %1695, %v1666
        %v1697 = vpop.permute.xlu0 %1696
        %1699 = vset.pattern.permute.xlu0 0
        %1700 = vperm.xlu0 %1699, %v1670
        %v1701 = vpop.permute.xlu0 %1700
        %1703 = vset.pattern.permute.xlu0 0
        %1704 = vperm.xlu0 %1703, %v1674
        %v1705 = vpop.permute.xlu0 %1704
        %1707 = vset.pattern.permute.xlu0 0
        %1708 = vperm.xlu0 %1707, %v1678
        %v1709 = vpop.permute.xlu0 %1708
        %v1711 = vmul.f32 %v1681, %v603
        %v1712 = vmul.f32 %v1685, %v603
        %v1713 = vmul.f32 %v1689, %v603
        %v1714 = vmul.f32 %v1693, %v603
        %v1715 = vmul.f32 %v1697, %v603
        %v1716 = vmul.f32 %v1701, %v603
        %v1717 = vmul.f32 %v1705, %v603
        %v1718 = vmul.f32 %v1709, %v603
        %v1727 = vlaneseq
        %v1728 = vshrl.u32 %v1727, 7
        %v1729 = vsub.s32 0, %v1728
        %v1730 = vrot.slane %v605, %v1729
        %v1731 = vlaneseq
        %v1732 = vshrl.u32 %v1731, 7
        %v1733 = vsub.s32 0, %v1732
        %v1734 = vrot.slane %v606, %v1733
        %v1735 = vlaneseq
        %v1736 = vshrl.u32 %v1735, 7
        %v1737 = vsub.s32 0, %v1736
        %v1738 = vrot.slane %v607, %v1737
        %v1739 = vlaneseq
        %v1740 = vshrl.u32 %v1739, 7
        %v1741 = vsub.s32 0, %v1740
        %v1742 = vrot.slane %v608, %v1741
        %v1743 = vlaneseq
        %v1744 = vshrl.u32 %v1743, 7
        %v1745 = vsub.s32 0, %v1744
        %v1746 = vrot.slane %v609, %v1745
        %v1747 = vlaneseq
        %v1748 = vshrl.u32 %v1747, 7
        %v1749 = vsub.s32 0, %v1748
        %v1750 = vrot.slane %v610, %v1749
        %v1751 = vlaneseq
        %v1752 = vshrl.u32 %v1751, 7
        %v1753 = vsub.s32 0, %v1752
        %v1754 = vrot.slane %v611, %v1753
        %v1755 = vlaneseq
        %v1756 = vshrl.u32 %v1755, 7
        %v1757 = vsub.s32 0, %v1756
        %v1758 = vrot.slane %v612, %v1757
        %1759 = vset.pattern.permute.xlu0 0
        %1760 = vperm.xlu0 %1759, %v1730
        %v1761 = vpop.permute.xlu0 %1760
        %1763 = vset.pattern.permute.xlu0 0
        %1764 = vperm.xlu0 %1763, %v1734
        %v1765 = vpop.permute.xlu0 %1764
        %1767 = vset.pattern.permute.xlu0 0
        %1768 = vperm.xlu0 %1767, %v1738
        %v1769 = vpop.permute.xlu0 %1768
        %1771 = vset.pattern.permute.xlu0 0
        %1772 = vperm.xlu0 %1771, %v1742
        %v1773 = vpop.permute.xlu0 %1772
        %1775 = vset.pattern.permute.xlu0 0
        %1776 = vperm.xlu0 %1775, %v1746
        %v1777 = vpop.permute.xlu0 %1776
        %1779 = vset.pattern.permute.xlu0 0
        %1780 = vperm.xlu0 %1779, %v1750
        %v1781 = vpop.permute.xlu0 %1780
        %1783 = vset.pattern.permute.xlu0 0
        %1784 = vperm.xlu0 %1783, %v1754
        %v1785 = vpop.permute.xlu0 %1784
        %1787 = vset.pattern.permute.xlu0 0
        %1788 = vperm.xlu0 %1787, %v1758
        %v1789 = vpop.permute.xlu0 %1788
        %v1791 = vmul.f32 %v1761, %v604
        %v1792 = vmul.f32 %v1765, %v604
        %v1793 = vmul.f32 %v1769, %v604
        %v1794 = vmul.f32 %v1773, %v604
        %v1795 = vmul.f32 %v1777, %v604
        %v1796 = vmul.f32 %v1781, %v604
        %v1797 = vmul.f32 %v1785, %v604
        %v1798 = vmul.f32 %v1789, %v604
        %v1799 = vadd.f32 %v1711, %v1791
        %v1800 = vadd.f32 %v1712, %v1792
        %v1801 = vadd.f32 %v1713, %v1793
        %v1802 = vadd.f32 %v1714, %v1794
        %v1803 = vadd.f32 %v1715, %v1795
        %v1804 = vadd.f32 %v1716, %v1796
        %v1805 = vadd.f32 %v1717, %v1797
        %v1806 = vadd.f32 %v1718, %v1798
        %v1815 = vlaneseq
        %v1816 = vshrl.u32 %v1815, 7
        %v1817 = vsub.s32 0, %v1816
        %v1818 = vrot.slane %v613, %v1817
        %v1819 = vlaneseq
        %v1820 = vshrl.u32 %v1819, 7
        %v1821 = vsub.s32 0, %v1820
        %v1822 = vrot.slane %v614, %v1821
        %v1823 = vlaneseq
        %v1824 = vshrl.u32 %v1823, 7
        %v1825 = vsub.s32 0, %v1824
        %v1826 = vrot.slane %v615, %v1825
        %v1827 = vlaneseq
        %v1828 = vshrl.u32 %v1827, 7
        %v1829 = vsub.s32 0, %v1828
        %v1830 = vrot.slane %v616, %v1829
        %v1831 = vlaneseq
        %v1832 = vshrl.u32 %v1831, 7
        %v1833 = vsub.s32 0, %v1832
        %v1834 = vrot.slane %v617, %v1833
        %v1835 = vlaneseq
        %v1836 = vshrl.u32 %v1835, 7
        %v1837 = vsub.s32 0, %v1836
        %v1838 = vrot.slane %v618, %v1837
        %v1839 = vlaneseq
        %v1840 = vshrl.u32 %v1839, 7
        %v1841 = vsub.s32 0, %v1840
        %v1842 = vrot.slane %v619, %v1841
        %v1843 = vlaneseq
        %v1844 = vshrl.u32 %v1843, 7
        %v1845 = vsub.s32 0, %v1844
        %v1846 = vrot.slane %v620, %v1845
        %1847 = vset.pattern.permute.xlu0 0
        %1848 = vperm.xlu0 %1847, %v1818
        %v1849 = vpop.permute.xlu0 %1848
        %1851 = vset.pattern.permute.xlu0 0
        %1852 = vperm.xlu0 %1851, %v1822
        %v1853 = vpop.permute.xlu0 %1852
        %1855 = vset.pattern.permute.xlu0 0
        %1856 = vperm.xlu0 %1855, %v1826
        %v1857 = vpop.permute.xlu0 %1856
        %1859 = vset.pattern.permute.xlu0 0
        %1860 = vperm.xlu0 %1859, %v1830
        %v1861 = vpop.permute.xlu0 %1860
        %1863 = vset.pattern.permute.xlu0 0
        %1864 = vperm.xlu0 %1863, %v1834
        %v1865 = vpop.permute.xlu0 %1864
        %1867 = vset.pattern.permute.xlu0 0
        %1868 = vperm.xlu0 %1867, %v1838
        %v1869 = vpop.permute.xlu0 %1868
        %1871 = vset.pattern.permute.xlu0 0
        %1872 = vperm.xlu0 %1871, %v1842
        %v1873 = vpop.permute.xlu0 %1872
        %1875 = vset.pattern.permute.xlu0 0
        %1876 = vperm.xlu0 %1875, %v1846
        %v1877 = vpop.permute.xlu0 %1876
        %v1879 = vmul.f32 %v1593, %v1849
        %v1880 = vmul.f32 %v1598, %v1853
        %v1881 = vmul.f32 %v1603, %v1857
        %v1882 = vmul.f32 %v1608, %v1861
        %v1883 = vmul.f32 %v1613, %v1865
        %v1884 = vmul.f32 %v1618, %v1869
        %v1885 = vmul.f32 %v1623, %v1873
        %v1886 = vmul.f32 %v1628, %v1877
        %v1887 = vadd.f32 %v1879, %v1799
        %v1888 = vadd.f32 %v1880, %v1800
        %v1889 = vadd.f32 %v1881, %v1801
        %v1890 = vadd.f32 %v1882, %v1802
        %v1891 = vadd.f32 %v1883, %v1803
        %v1892 = vadd.f32 %v1884, %v1804
        %v1893 = vadd.f32 %v1885, %v1805
        %v1894 = vadd.f32 %v1886, %v1806
        %1895 = vst.msk [vmem:[%s594] sm:$0xff] %vm636, %v1887
        %1896 = vst.msk [vmem:[%s594 + $0x8] sm:$0xff] %vm636, %v1888
        %1897 = vst.msk [vmem:[%s594 + $0x10] sm:$0xff] %vm636, %v1889
        %1898 = vst.msk [vmem:[%s594 + $0x18] sm:$0xff] %vm636, %v1890
        %1899 = vst.msk [vmem:[%s594 + $0x20] sm:$0xff] %vm636, %v1891
        %1900 = vst.msk [vmem:[%s594 + $0x28] sm:$0xff] %vm636, %v1892
        %1901 = vst.msk [vmem:[%s594 + $0x30] sm:$0xff] %vm636, %v1893
        %1902 = vst.msk [vmem:[%s594 + $0x38] sm:$0xff] %vm636, %v1894
        %s1903 = sand.u32 %s384, 1
        %s1904 = sand.u32 %s384, 1
        %s1905 = smul.addr %s1904, 64
        %s1906 = scalar_lea.vmem [#allocation10], %s1905
        // Predicated region
        $region105: #{tpu_custom_call.1} parent=83 // pred_check
          %p1907 = pneg %p394
        $region106: #{tpu_custom_call.1} parent=83 // pred_check_branch
          %1909 = sbr.rel (%p1907) target = $region108
        $region107: #{tpu_custom_call.1} parent=83 // pred_region
          %s1910 = smul.addr %s30, 8
          %s1911 = scalar_lea.vmem %s16, %s1910
          // Predicated region
          $region109: #{tpu_custom_call.1} parent=107 // pred_check
            _
          $region110: #{tpu_custom_call.1} parent=107 // pred_check_branch
            %1913 = sbr.rel (0) target = $region112
          $region111: #{tpu_custom_call.1} parent=107 // pred_region
            // Predicated region
            $region113: #{tpu_custom_call.1} parent=111 // pred_check
              _
            $region114: #{tpu_custom_call.1} parent=111 // pred_check_branch
              %1915 = sbr.rel (0) target = $region116
            $region115: #{tpu_custom_call.1} parent=111 // pred_region
              // Predicated region
              $region128: #{tpu_custom_call.1} parent=115 // pred_check
                _
              $region129: #{tpu_custom_call.1} parent=115 // pred_check_branch
                %1944 = sbr.rel (0) target = $region131
              $region130: #{tpu_custom_call.1} parent=115 // pred_region
                loop: start=0, step=1, limit=1
                $region132: #{tpu_custom_call.1} parent=130 // loop_pre_header
                  _
                $region133: #{tpu_custom_call.1} parent=130 // loop_header
                  %s1946 = sphi 0, %s1950
                  %p1947 = scmp.ge.s32.totalorder %s1946, 1
                  %s1951 = sphi %s1906, %s1906
                  %s1952 = sphi %s1911, %s1911
                $region134: #{tpu_custom_call.1} parent=130 // loop_header_branch
                  %1949 = sbr.rel (%p1947) target = $region138
                $region135: #{tpu_custom_call.1} parent=130 // loop_body
                  %v1953 = vld [vmem:[%s1951] sm:$0xff]
                  %1954 = vst [vmem:[%s1952] sm:$0xff] %v1953
                  %v1955 = vld [vmem:[%s1951 + $0x8] sm:$0xff]
                  %1956 = vst [vmem:[%s1952 + $0x18] sm:$0xff] %v1955
                  %v1957 = vld [vmem:[%s1951 + $0x10] sm:$0xff]
                  %1958 = vst [vmem:[%s1952 + $0x30] sm:$0xff] %v1957
                  %v1959 = vld [vmem:[%s1951 + $0x18] sm:$0xff]
                  %1960 = vst [vmem:[%s1952 + $0x48] sm:$0xff] %v1959
                  %v1961 = vld [vmem:[%s1951 + $0x20] sm:$0xff]
                  %1962 = vst [vmem:[%s1952 + $0x60] sm:$0xff] %v1961
                  %v1963 = vld [vmem:[%s1951 + $0x28] sm:$0xff]
                  %1964 = vst [vmem:[%s1952 + $0x78] sm:$0xff] %v1963
                  %v1965 = vld [vmem:[%s1951 + $0x30] sm:$0xff]
                  %1966 = vst [vmem:[%s1952 + $0x90] sm:$0xff] %v1965
                  %v1967 = vld [vmem:[%s1951 + $0x38] sm:$0xff]
                  %1968 = vst [vmem:[%s1952 + $0xa8] sm:$0xff] %v1967
                $region136: #{tpu_custom_call.1} parent=130 // loop_footer
                  %s1950 = sadd.s32 1, %s1946
                $region137: #{tpu_custom_call.1} parent=130 // loop_footer_branch
                  %1945 = sbr.rel target = $region133
                $region138: #{tpu_custom_call.1} parent=130 // loop_exit
                  _
              $region131: #{tpu_custom_call.1} parent=115 // pred_fallthru
                _
              // Predicated region
              $region139: #{tpu_custom_call.1} parent=115 // pred_check
                _
              $region140: #{tpu_custom_call.1} parent=115 // pred_check_branch
                %1970 = sbr.rel target = $region142
              $region141: #{tpu_custom_call.1} parent=115 // pred_region
                _
              $region142: #{tpu_custom_call.1} parent=115 // pred_fallthru
                _
            $region116: #{tpu_custom_call.1} parent=111 // pred_fallthru
              _
            // Predicated region
            $region117: #{tpu_custom_call.1} parent=111 // pred_check
              _
            $region118: #{tpu_custom_call.1} parent=111 // pred_check_branch
              %1917 = sbr.rel target = $region120
            $region119: #{tpu_custom_call.1} parent=111 // pred_region
              loop: start=0, step=1, limit=1
              $region121: #{tpu_custom_call.1} parent=119 // loop_pre_header
                _
              $region122: #{tpu_custom_call.1} parent=119 // loop_header
                %s1920 = sphi 0, %s1924
                %p1921 = scmp.ge.s32.totalorder %s1920, 1
                %s1925 = sphi %s1906, %s1906
                %s1926 = sphi %s1911, %s1911
              $region123: #{tpu_custom_call.1} parent=119 // loop_header_branch
                %1923 = sbr.rel (%p1921) target = $region127
              $region124: #{tpu_custom_call.1} parent=119 // loop_body
                %v1927 = vld [vmem:[%s1925] sm:$0xff]
                %1928 = vst [vmem:[%s1926] sm:$0xff] %v1927
                %v1929 = vld [vmem:[%s1925 + $0x8] sm:$0xff]
                %1930 = vst [vmem:[%s1926 + $0x18] sm:$0xff] %v1929
                %v1931 = vld [vmem:[%s1925 + $0x10] sm:$0xff]
                %1932 = vst [vmem:[%s1926 + $0x30] sm:$0xff] %v1931
                %v1933 = vld [vmem:[%s1925 + $0x18] sm:$0xff]
                %1934 = vst [vmem:[%s1926 + $0x48] sm:$0xff] %v1933
                %v1935 = vld [vmem:[%s1925 + $0x20] sm:$0xff]
                %1936 = vst [vmem:[%s1926 + $0x60] sm:$0xff] %v1935
                %v1937 = vld [vmem:[%s1925 + $0x28] sm:$0xff]
                %1938 = vst [vmem:[%s1926 + $0x78] sm:$0xff] %v1937
                %v1939 = vld [vmem:[%s1925 + $0x30] sm:$0xff]
                %1940 = vst [vmem:[%s1926 + $0x90] sm:$0xff] %v1939
                %v1941 = vld [vmem:[%s1925 + $0x38] sm:$0xff]
                %1942 = vst [vmem:[%s1926 + $0xa8] sm:$0xff] %v1941
              $region125: #{tpu_custom_call.1} parent=119 // loop_footer
                %s1924 = sadd.s32 1, %s1920
              $region126: #{tpu_custom_call.1} parent=119 // loop_footer_branch
                %1919 = sbr.rel target = $region122
              $region127: #{tpu_custom_call.1} parent=119 // loop_exit
                _
            $region120: #{tpu_custom_call.1} parent=111 // pred_fallthru
              _
          $region112: #{tpu_custom_call.1} parent=107 // pred_fallthru
            _
          %1971 = vnop
        $region108: #{tpu_custom_call.1} parent=83 // pred_fallthru
          _
      $region84: #{tpu_custom_call.1} parent=5 // pred_fallthru
        _
      %p1972 = scmp.le.s32.totalorder 2, %s25
      // Predicated region
      $region143: #{tpu_custom_call.1} parent=5 // pred_check
        %p1973 = pneg %p1972
      $region144: #{tpu_custom_call.1} parent=5 // pred_check_branch
        %1975 = sbr.rel (%p1973) target = $region146
      $region145: #{tpu_custom_call.1} parent=5 // pred_region
        %s1976 = ssub.s32 %s25, 2
        // Predicated region
        $region147: #{tpu_custom_call.1} parent=145 // pred_check
          %p1977 = pneg %p400
        $region148: #{tpu_custom_call.1} parent=145 // pred_check_branch
          %1979 = sbr.rel (%p1977) target = $region150
        $region149: #{tpu_custom_call.1} parent=145 // pred_region
          %s1980 = sand.u32 %s385, 1
          %s1981 = sand.u32 %s385, 1
          %s1982 = smul.addr %s1981, 64
          %s1983 = scalar_lea.vmem [#allocation10], %s1982
        $region150: #{tpu_custom_call.1} parent=145 // pred_fallthru
          _
      $region146: #{tpu_custom_call.1} parent=5 // pred_fallthru
        _
    $region6: #{tpu_custom_call.1} parent=1 // loop_footer
      %s29 = sadd.s32 1, %s25
    $region7: #{tpu_custom_call.1} parent=1 // loop_footer_branch
      %24 = sbr.rel target = $region3
    $region8: #{tpu_custom_call.1} parent=1 // loop_exit
      _
    %1984 = vsyncpa [#allocation3], 1
    %s1985 = scalar_lea.sflag [#allocation3], 1
    %1986 = vsyncpa %s1985, 1
    %1987 = vsyncpa [#allocation5], 1
    %1988 = vsyncpa [#allocation8], 1

</llo_original>
